<compile_context>
chip_gen: v5e
topology: v5e:2x2
jax: 0.10.0
libtpu: 0.0.40
codegen_flags: <defaults>
</compile_context>

<pallas_src>
import functools

import jax
import jax.numpy as jnp
from jax.experimental import pallas as pl
from jax.experimental.pallas import tpu as pltpu


def _round_up(v, m):
    return -(-v // m) * m


def _pair(v):
    return (v, v) if isinstance(v, int) else tuple(v)


def _vmem_estimate(tm, halo_pad, cin, cout_pad, kh, kw, wp):
    """Rough per-step VMEM footprint (bytes) of the kernel below."""
    span = tm + (kh - 1) * wp
    est = 0
    est += 2 * tm * cin * 2                    # input tile, double-buffered bf16
    est += 2 * halo_pad * cin * 2              # halo tile
    est += 2 * kh * kw * cin * cout_pad * 2    # resident weights (conservative x2)
    est += 4 * cout_pad * 4                    # scale + bias
    est += 2 * tm * cout_pad * 2               # bf16 output, double-buffered
    est += (tm + halo_pad) * cin * 4           # f32 window
    est += span * kw * cin * 4                 # f32 lane-folded window
    est += tm * kw * cin * 2                   # per-dh bf16 operand
    est += tm * cout_pad * 4                   # f32 accumulator
    return est


def _conv_bn_relu_kernel(x_ref, halo_ref, w_ref, scale_ref, bias_ref, o_ref,
                         *, kh, kw, wp):
    """One (tm, Cout_pad) output row tile of fused conv + BN + ReLU.

    x_ref    : (tm, Cin)            bf16   rows [i*tm, (i+1)*tm) of padded flat input
    halo_ref : (1, halo_pad, Cin)   bf16   rows [(i+1)*tm, (i+1)*tm + halo_pad)
    w_ref    : (kh, kw*Cin, Cout_pad) bf16 per-row weights (kw folded into K)
    scale_ref: (1, Cout_pad)        f32    folded BN scale
    bias_ref : (1, Cout_pad)        f32    folded BN bias
    o_ref    : (tm, Cout_pad)       bf16
    """
    tm = o_ref.shape[0]

    if kh == 1 and kw == 1:
        # 1x1 conv: no halo / shifting needed, single MXU dot.
        acc = jnp.dot(x_ref[...], w_ref[0], preferred_element_type=jnp.float32)
    else:
        # Window = current rows + small halo; one f32 upcast so the arbitrary
        # (possibly odd) sublane-offset slices below stay on unpacked layouts.
        win = jnp.concatenate(
            [x_ref[...].astype(jnp.float32), halo_ref[0].astype(jnp.float32)],
            axis=0)                                        # (tm + halo_pad, Cin)
        # Fold the kw taps into the contraction dim: one lane-concat of the kw
        # row-shifted views; per-dh operands are then plain row slices of it.
        span = tm + (kh - 1) * wp
        wide = jnp.concatenate(
            [jax.lax.slice_in_dim(win, dw, dw + span, axis=0)
             for dw in range(kw)], axis=1)                 # (span, kw*Cin) f32
        acc = None
        for dh in range(kh):                               # unrolled: kh MXU dots
            op = jax.lax.slice_in_dim(wide, dh * wp, dh * wp + tm, axis=0)
            d = jnp.dot(op.astype(jnp.bfloat16), w_ref[dh],
                        preferred_element_type=jnp.float32)
            acc = d if acc is None else acc + d

    y = acc * scale_ref[...] + bias_ref[...]               # BN (inference) in f32
    o_ref[...] = jnp.maximum(y, 0.0).astype(o_ref.dtype)   # ReLU, bf16 store


def basic_conv2d_nhwc(x_nhwc, weight, gamma, beta, running_mean, running_var,
                      *, stride=1, padding=0, eps=1e-3, tm=512):
    """Fused Conv2d(bias=False) + BatchNorm2d(inference) + ReLU.

    x_nhwc : (N, H, W, Cin); weight: (Cout, Cin, kh, kw) (PyTorch OIHW layout).
    Returns (N, Hout, Wout, Cout) in bfloat16 (downstream layers consume bf16).
    """
    N, H, W, Cin = x_nhwc.shape
    Cout, Cin_w, kh, kw = weight.shape
    assert Cin_w == Cin, "groups != 1 not supported"
    sh_, sw_ = _pair(stride)
    ph, pw = _pair(padding)

    Hp, Wp = H + 2 * ph, W + 2 * pw
    Hout = (Hp - kh) // sh_ + 1
    Wout = (Wp - kw) // sw_ + 1

    # Pre-cast to bf16 once, zero-pad spatially, flatten (n, hp, wp) into rows.
    xp = jnp.pad(x_nhwc.astype(jnp.bfloat16),
                 ((0, 0), (ph, ph), (pw, pw), (0, 0)))
    Mrows = N * Hp * Wp
    x_flat = xp.reshape(Mrows, Cin)

    # Largest row offset any tap reaches beyond the current row.
    max_shift = (kh - 1) * Wp + (kw - 1)
    halo_pad = max(16, _round_up(max_shift, 16))

    # Lane-dense output padding (128 up to 128 channels, else 256-multiples for
    # the 256-wide v6e/v7x MXU).
    Cout_pad = 128 if Cout <= 128 else _round_up(Cout, 256)

    # Row tile: multiple of 16, >= halo_pad, shrunk if the VMEM estimate would
    # crowd the 32 MiB default scoped limit (v7x has only 64 MiB physical).
    tm = _round_up(max(int(tm), halo_pad), 16)
    budget = 24 << 20
    while tm > halo_pad and _vmem_estimate(tm, halo_pad, Cin, Cout_pad,
                                           kh, kw, Wp) > budget:
        tm = max(halo_pad, _round_up(max(tm // 2, 16), 16))

    num_tiles = pl.cdiv(Mrows, tm)
    rows_padded = (num_tiles + 1) * tm          # +1 tile: zero halo for the tail
    x_flat = jnp.pad(x_flat, ((0, rows_padded - Mrows), (0, 0)))

    # Small per-tile halo: halo[i] = rows [(i+1)*tm, (i+1)*tm + halo_pad).
    halo = x_flat[tm:rows_padded].reshape(num_tiles, tm, Cin)[:, :halo_pad, :]

    # Weights OIHW -> (kh, kw*Cin, Cout_pad) bf16; column order matches the
    # kernel's lane-concat (dw-major, then channel).  BN scale stays f32.
    w_taps = jnp.transpose(weight, (2, 3, 1, 0)).reshape(kh, kw * Cin, Cout)
    w_taps = jnp.pad(w_taps, ((0, 0), (0, 0), (0, Cout_pad - Cout)))
    w_taps = w_taps.astype(jnp.bfloat16)

    scale = (gamma / jnp.sqrt(running_var + eps)).astype(jnp.float32)
    bias = (beta - running_mean * scale).astype(jnp.float32)
    scale_p = jnp.pad(scale, (0, Cout_pad - Cout)).reshape(1, Cout_pad)
    bias_p = jnp.pad(bias, (0, Cout_pad - Cout)).reshape(1, Cout_pad)

    kernel = functools.partial(_conv_bn_relu_kernel, kh=kh, kw=kw, wp=Wp)
    out_flat = pl.pallas_call(
        kernel,
        out_shape=jax.ShapeDtypeStruct((num_tiles * tm, Cout_pad), jnp.bfloat16),
        grid_spec=pltpu.PrefetchScalarGridSpec(
            num_scalar_prefetch=0,
            grid=(num_tiles,),
            in_specs=[
                pl.BlockSpec((tm, Cin), lambda i: (i, 0)),            # row tile
                pl.BlockSpec((1, halo_pad, Cin), lambda i: (i, 0, 0)),  # halo
                pl.BlockSpec((kh, kw * Cin, Cout_pad), lambda i: (0, 0, 0)),
                pl.BlockSpec((1, Cout_pad), lambda i: (0, 0)),        # BN scale
                pl.BlockSpec((1, Cout_pad), lambda i: (0, 0)),        # BN bias
            ],
            out_specs=pl.BlockSpec((tm, Cout_pad), lambda i: (i, 0)),
        ),
        compiler_params=pltpu.CompilerParams(
            dimension_semantics=("parallel",)),
    )(x_flat, halo, w_taps, scale_p, bias_p)

    # Rows outside the valid conv support (and the tile padding) are garbage by
    # construction; this slicing removes them -- do not drop it.
    out = out_flat[:Mrows].reshape(N, Hp, Wp, Cout_pad)
    out = out[:, : (Hout - 1) * sh_ + 1 : sh_,
              : (Wout - 1) * sw_ + 1 : sw_, :Cout]
    return out


def basic_conv2d(x_nchw, weight, gamma, beta, running_mean, running_var,
                 *, stride=1, padding=0, eps=1e-3, tm=512):
    """PyTorch-layout wrapper: (N, Cin, H, W) in, (N, Cout, Hout, Wout) out."""
    x_nhwc = jnp.transpose(x_nchw, (0, 2, 3, 1))
    out = basic_conv2d_nhwc(x_nhwc, weight, gamma, beta, running_mean,
                            running_var, stride=stride, padding=padding,
                            eps=eps, tm=tm)
    return jnp.transpose(out, (0, 3, 1, 2)).astype(x_nchw.dtype)


if __name__ == "__main__":
    key = jax.random.PRNGKey(0)
    N, Cin, H, W = 2, 4, 16, 16
    Cout, kh, kw = 8, 3, 3

    k1, k2 = jax.random.split(key)
    x = jax.random.normal(k1, (N, Cin, H, W), dtype=jnp.float32)
    weight = jax.random.normal(k2, (Cout, Cin, kh, kw), dtype=jnp.float32) * 0.1

    # Deterministic BatchNorm parameters / running stats.
    gamma = 1.0 + 0.1 * jnp.arange(Cout, dtype=jnp.float32)
    beta = 0.05 * jnp.arange(Cout, dtype=jnp.float32)
    running_mean = 0.02 * jnp.arange(Cout, dtype=jnp.float32)
    running_var = 1.0 + 0.01 * jnp.arange(Cout, dtype=jnp.float32)

    out = basic_conv2d(x, weight, gamma, beta, running_mean, running_var,
                       stride=1, padding=1, eps=1e-3)
    out = jax.block_until_ready(out)

    # Reference: lax.conv in f32 + same BN fold + ReLU.
    ref_conv = jax.lax.conv_general_dilated(
        x, weight, window_strides=(1, 1), padding=((1, 1), (1, 1)),
        dimension_numbers=("NCHW", "OIHW", "NCHW"))
    scale = gamma / jnp.sqrt(running_var + 1e-3)
    bias = beta - running_mean * scale
    ref = jnp.maximum(ref_conv * scale[None, :, None, None]
                      + bias[None, :, None, None], 0.0)

    assert out.shape == (N, Cout, H, W), out.shape
    # bf16 MXU operands + bf16 output -> loosened tolerance vs f32 reference.
    err = float(jnp.max(jnp.abs(out - ref)))
    assert err < 1e-1, f"max abs error {err}"

    print("KERNEL_OK")
</pallas_src>

<mosaic_0001>
module attributes {stable_mosaic.version = 11 : i64} {
  func.func @_conv_bn_relu_kernel(%arg0: i32, %arg1: memref<512x4xbf16, #tpu.memory_space<vmem>>, %arg2: memref<1x48x4xbf16, #tpu.memory_space<vmem>>, %arg3: memref<3x12x128xbf16, #tpu.memory_space<vmem>>, %arg4: memref<1x128xf32, #tpu.memory_space<vmem>>, %arg5: memref<1x128xf32, #tpu.memory_space<vmem>>, %arg6: memref<512x128xbf16, #tpu.memory_space<vmem>>) attributes {dimension_semantics = [#tpu.dimension_semantics<parallel>], iteration_bounds = array<i64: 2>, scalar_prefetch = 0 : i64, scratch_operands = 0 : i64, tpu.core_type = #tpu.core_type<tc>, window_params = [{transform_indices = @transform_0, window_bounds = array<i64: 512, 4>}, {transform_indices = @transform_1, window_bounds = array<i64: 1, 48, 4>}, {pipeline_mode = #tpu.pipeline_mode<synchronous>, transform_indices = @transform_2, window_bounds = array<i64: 3, 12, 128>}, {pipeline_mode = #tpu.pipeline_mode<synchronous>, transform_indices = @transform_3, window_bounds = array<i64: 1, 128>}, {pipeline_mode = #tpu.pipeline_mode<synchronous>, transform_indices = @transform_4, window_bounds = array<i64: 1, 128>}, {transform_indices = @transform_5, window_bounds = array<i64: 512, 128>}]} {
    %c0 = arith.constant 0 : index
    %c0_0 = arith.constant 0 : index
    %0 = vector.load %arg1[%c0, %c0_0] : memref<512x4xbf16, #tpu.memory_space<vmem>>, vector<512x4xbf16>
    %1 = arith.extf %0 : vector<512x4xbf16> to vector<512x4xf32>
    %c0_1 = arith.constant 0 : index
    %c0_2 = arith.constant 0 : index
    %c0_3 = arith.constant 0 : index
    %2 = vector.load %arg2[%c0_1, %c0_2, %c0_3] : memref<1x48x4xbf16, #tpu.memory_space<vmem>>, vector<1x48x4xbf16>
    %3 = vector.shape_cast %2 : vector<1x48x4xbf16> to vector<48x4xbf16>
    %4 = arith.extf %3 : vector<48x4xbf16> to vector<48x4xf32>
    %5 = tpu.concatenate %1, %4 in 0 : vector<512x4xf32>, vector<48x4xf32> -> vector<560x4xf32>
    %6 = vector.extract_strided_slice %5 {offsets = [0, 0], sizes = [548, 4], strides = [1, 1]} : vector<560x4xf32> to vector<548x4xf32>
    %7 = vector.extract_strided_slice %5 {offsets = [1, 0], sizes = [548, 4], strides = [1, 1]} : vector<560x4xf32> to vector<548x4xf32>
    %8 = vector.extract_strided_slice %5 {offsets = [2, 0], sizes = [548, 4], strides = [1, 1]} : vector<560x4xf32> to vector<548x4xf32>
    %9 = tpu.concatenate %6, %7, %8 in 1 : vector<548x4xf32>, vector<548x4xf32>, vector<548x4xf32> -> vector<548x12xf32>
    %10 = vector.extract_strided_slice %9 {offsets = [0, 0], sizes = [512, 12], strides = [1, 1]} : vector<548x12xf32> to vector<512x12xf32>
    %11 = arith.truncf %10 : vector<512x12xf32> to vector<512x12xbf16>
    %c0_4 = arith.constant 0 : index
    %c0_5 = arith.constant 0 : index
    %c0_6 = arith.constant 0 : index
    %12 = vector.load %arg3[%c0_4, %c0_5, %c0_6] : memref<3x12x128xbf16, #tpu.memory_space<vmem>>, vector<1x12x128xbf16>
    %13 = vector.shape_cast %12 : vector<1x12x128xbf16> to vector<12x128xbf16>
    %cst = arith.constant dense<0.000000e+00> : vector<512x128xf32>
    %14 = tpu.matmul %11, %13, %cst {dimension_numbers = #tpu.dot_dimension_numbers<[1], [0], [0], [1], [0, 0, 1, 1], [], []>} : vector<512x12xbf16>, vector<12x128xbf16>, vector<512x128xf32> -> vector<512x128xf32>
    %15 = vector.extract_strided_slice %9 {offsets = [18, 0], sizes = [512, 12], strides = [1, 1]} : vector<548x12xf32> to vector<512x12xf32>
    %16 = arith.truncf %15 : vector<512x12xf32> to vector<512x12xbf16>
    %c1 = arith.constant 1 : index
    %c0_7 = arith.constant 0 : index
    %c0_8 = arith.constant 0 : index
    %17 = vector.load %arg3[%c1, %c0_7, %c0_8] : memref<3x12x128xbf16, #tpu.memory_space<vmem>>, vector<1x12x128xbf16>
    %18 = vector.shape_cast %17 : vector<1x12x128xbf16> to vector<12x128xbf16>
    %cst_9 = arith.constant dense<0.000000e+00> : vector<512x128xf32>
    %19 = tpu.matmul %16, %18, %cst_9 {dimension_numbers = #tpu.dot_dimension_numbers<[1], [0], [0], [1], [0, 0, 1, 1], [], []>} : vector<512x12xbf16>, vector<12x128xbf16>, vector<512x128xf32> -> vector<512x128xf32>
    %20 = arith.addf %14, %19 : vector<512x128xf32>
    %21 = vector.extract_strided_slice %9 {offsets = [36, 0], sizes = [512, 12], strides = [1, 1]} : vector<548x12xf32> to vector<512x12xf32>
    %22 = arith.truncf %21 : vector<512x12xf32> to vector<512x12xbf16>
    %c2 = arith.constant 2 : index
    %c0_10 = arith.constant 0 : index
    %c0_11 = arith.constant 0 : index
    %23 = vector.load %arg3[%c2, %c0_10, %c0_11] : memref<3x12x128xbf16, #tpu.memory_space<vmem>>, vector<1x12x128xbf16>
    %24 = vector.shape_cast %23 : vector<1x12x128xbf16> to vector<12x128xbf16>
    %cst_12 = arith.constant dense<0.000000e+00> : vector<512x128xf32>
    %25 = tpu.matmul %22, %24, %cst_12 {dimension_numbers = #tpu.dot_dimension_numbers<[1], [0], [0], [1], [0, 0, 1, 1], [], []>} : vector<512x12xbf16>, vector<12x128xbf16>, vector<512x128xf32> -> vector<512x128xf32>
    %26 = arith.addf %20, %25 : vector<512x128xf32>
    %c0_13 = arith.constant 0 : index
    %c0_14 = arith.constant 0 : index
    %27 = vector.load %arg4[%c0_13, %c0_14] : memref<1x128xf32, #tpu.memory_space<vmem>>, vector<1x128xf32>
    %28 = vector.broadcast %27 : vector<1x128xf32> to vector<512x128xf32>
    %29 = arith.mulf %26, %28 : vector<512x128xf32>
    %c0_15 = arith.constant 0 : index
    %c0_16 = arith.constant 0 : index
    %30 = vector.load %arg5[%c0_15, %c0_16] : memref<1x128xf32, #tpu.memory_space<vmem>>, vector<1x128xf32>
    %31 = vector.broadcast %30 : vector<1x128xf32> to vector<512x128xf32>
    %32 = arith.addf %29, %31 : vector<512x128xf32>
    %cst_17 = arith.constant 0.000000e+00 : f32
    %33 = vector.broadcast %cst_17 : f32 to vector<512x128xf32>
    %34 = arith.maximumf %32, %33 : vector<512x128xf32>
    %35 = arith.truncf %34 : vector<512x128xf32> to vector<512x128xbf16>
    %c0_18 = arith.constant 0 : index
    %c0_19 = arith.constant 0 : index
    %36 = vector.load %arg6[%c0_18, %c0_19] : memref<512x128xbf16, #tpu.memory_space<vmem>>, vector<512x128xbf16>
    tpu.vector_store %arg6[%c0_18, %c0_19], %35 {strides = array<i32>} : memref<512x128xbf16, #tpu.memory_space<vmem>>, vector<512x128xbf16>,
    return
  }
  func.func @transform_0(%arg0: i32) -> (i32, i32) {
    %c0_i32 = arith.constant 0 : i32
    %c0_i32_0 = arith.constant 0 : i32
    return %arg0, %c0_i32 : i32, i32
  }
  func.func @transform_1(%arg0: i32) -> (i32, i32, i32) {
    %c0_i32 = arith.constant 0 : i32
    %c0_i32_0 = arith.constant 0 : i32
    %c0_i32_1 = arith.constant 0 : i32
    return %arg0, %c0_i32, %c0_i32_0 : i32, i32, i32
  }
  func.func @transform_2(%arg0: i32) -> (i32, i32, i32) {
    %c0_i32 = arith.constant 0 : i32
    %c0_i32_0 = arith.constant 0 : i32
    %c0_i32_1 = arith.constant 0 : i32
    %c0_i32_2 = arith.constant 0 : i32
    return %c0_i32, %c0_i32_0, %c0_i32_1 : i32, i32, i32
  }
  func.func @transform_3(%arg0: i32) -> (i32, i32) {
    %c0_i32 = arith.constant 0 : i32
    %c0_i32_0 = arith.constant 0 : i32
    %c0_i32_1 = arith.constant 0 : i32
    return %c0_i32, %c0_i32_0 : i32, i32
  }
  func.func @transform_4(%arg0: i32) -> (i32, i32) {
    %c0_i32 = arith.constant 0 : i32
    %c0_i32_0 = arith.constant 0 : i32
    %c0_i32_1 = arith.constant 0 : i32
    return %c0_i32, %c0_i32_0 : i32, i32
  }
  func.func @transform_5(%arg0: i32) -> (i32, i32) {
    %c0_i32 = arith.constant 0 : i32
    %c0_i32_0 = arith.constant 0 : i32
    return %arg0, %c0_i32 : i32, i32
  }
}

</mosaic_0001>

<llo_original>
// kernel: tpu_custom_call.1
$region0: #{tpu_custom_call.1}
  #allocation0 [shape = 'u32[]', space=smem, size = 0x4, offset = 0x4, fixed_abs, tag = 'smem constant byte address 0x4 - core index']
  #allocation1 [shape = 'u32[72,128]{1,0:T(1,128)}', space=vmem, size = 0x9000, scoped, tag = 'internal scratch']
  %s0 = inlined_call_operand.vmem [shape: bf16[1536,4], index: 0, kind: input, shape index: {}]
  %s1 = inlined_call_operand.vmem [shape: bf16[2,48,4], index: 1, kind: input, shape index: {}]
  %s2 = inlined_call_operand.vmem [shape: bf16[3,12,128], index: 2, kind: input, shape index: {}]
  %s3 = inlined_call_operand.vmem [shape: f32[1,128], index: 3, kind: input, shape index: {}]
  %s4 = inlined_call_operand.vmem [shape: f32[1,128], index: 4, kind: input, shape index: {}]
  %s5 = inlined_call_operand.hbm [shape: bf16[1024,128], index: 5, kind: output, shape index: {}]
  %s6 = sld [smem:[#allocation0]]
  $region53: #{tpu_custom_call.1} parent=0
    _
  %s8 = ssub.s32 1, %s6
  %s9 = scalar_select 0, %s8, %s6
  $region1: #{tpu_custom_call.1} parent=0
    #allocation2 [shape = 'u8[262144]{0}', space=vmem, size = 0x40000, scoped, tag = 'output window, operand 0']
    #allocation3 [shape = 's32[2]{0}', space=sflag, size = 0x8, scoped, tag = 'scoped memory for tpu_custom_call.1']
    %10 = vsyncpa [#allocation3], 0
    %s11 = scalar_lea.sflag [#allocation3], 1
    %12 = vsyncpa %s11, 0
    loop: start=0, step=1, limit=4
    $region2: #{tpu_custom_call.1} parent=1 // loop_pre_header
      _
    $region3: #{tpu_custom_call.1} parent=1 // loop_header
      %s14 = sphi 0, %s18
      %p15 = scmp.ge.s32.totalorder %s14, 4
      %s24 = sphi 0, %s26
      %s27 = sphi 0, %s24
      %s28 = sphi 0, %s27
      %s44 = sphi 0, %s28
      %s50 = sphi 0, %s52
      %s53 = sphi 0, %s50
      %s54 = sphi 0, %s53
      %s70 = sphi 0, %s54
      %s74 = sphi 0, %s74
      %s76 = sphi 0, %s74
      %s77 = sphi 0, %s76
      %s91 = sphi 0, %s77
      %s95 = sphi 0, %s95
      %s97 = sphi 0, %s95
      %s98 = sphi 0, %s97
      %s112 = sphi 0, %s98
      %s116 = sphi 0, %s116
      %s118 = sphi 0, %s116
      %s119 = sphi 0, %s118
      %s133 = sphi 0, %s119
      %s139 = sphi 0, %s141
      %s142 = sphi 0, %s139
      %s143 = sphi 0, %s142
      %s159 = sphi 0, %s143
    $region4: #{tpu_custom_call.1} parent=1 // loop_header_branch
      %17 = sbr.rel (%p15) target = $region8
    $region5: #{tpu_custom_call.1} parent=1 // loop_body
      %s19 = ssub.s32 %s14, 1
      %s20 = ssub.s32 %s14, 2
      %s21 = sadd.s32 %s14, 1
      %s22 = ssub.s32 %s14, %s21
      %p23 = scmp.eq.s32.totalorder %s22, 0
      %s25 = sadd.s32 %s24, 1
      %s26 = scalar_select %p23, %s24, %s25
      %p29 = pneg %p23
      %p30 = scmp.eq.s32.totalorder %s14, 1
      %p31 = por %p29, %p30
      %p32 = scmp.ne.s32.totalorder %s24, %s27
      %p33 = scmp.eq.s32.totalorder %s14, 0
      %p34 = por %p32, %p33
      %p35 = scmp.ne.s32.totalorder %s24, %s27
      %p36 = scmp.eq.s32.totalorder %s19, 1
      %p37 = por %p35, %p36
      %p38 = scmp.ne.s32.totalorder %s27, %s28
      %p39 = scmp.eq.s32.totalorder %s19, 0
      %p40 = por %p38, %p39
      %p41 = scmp.ne.s32.totalorder %s27, %s28
      %p42 = scmp.eq.s32.totalorder %s20, 1
      %p43 = por %p41, %p42
      %p45 = scmp.ne.s32.totalorder %s28, %s44
      %p46 = scmp.eq.s32.totalorder %s20, 0
      %p47 = por %p45, %p46
      %s48 = ssub.s32 %s14, %s21
      %p49 = scmp.eq.s32.totalorder %s48, 0
      %s51 = sadd.s32 %s50, 1
      %s52 = scalar_select %p49, %s50, %s51
      %p55 = pneg %p49
      %p56 = scmp.eq.s32.totalorder %s14, 1
      %p57 = por %p55, %p56
      %p58 = scmp.ne.s32.totalorder %s50, %s53
      %p59 = scmp.eq.s32.totalorder %s14, 0
      %p60 = por %p58, %p59
      %p61 = scmp.ne.s32.totalorder %s50, %s53
      %p62 = scmp.eq.s32.totalorder %s19, 1
      %p63 = por %p61, %p62
      %p64 = scmp.ne.s32.totalorder %s53, %s54
      %p65 = scmp.eq.s32.totalorder %s19, 0
      %p66 = por %p64, %p65
      %p67 = scmp.ne.s32.totalorder %s53, %s54
      %p68 = scmp.eq.s32.totalorder %s20, 1
      %p69 = por %p67, %p68
      %p71 = scmp.ne.s32.totalorder %s54, %s70
      %p72 = scmp.eq.s32.totalorder %s20, 0
      %p73 = por %p71, %p72
      %s75 = sadd.s32 %s74, 1
      %p78 = scmp.eq.s32.totalorder %s14, 1
      %p79 = scmp.ne.s32.totalorder %s74, %s76
      %p80 = scmp.eq.s32.totalorder %s14, 0
      %p81 = por %p79, %p80
      %p82 = scmp.ne.s32.totalorder %s74, %s76
      %p83 = scmp.eq.s32.totalorder %s19, 1
      %p84 = por %p82, %p83
      %p85 = scmp.ne.s32.totalorder %s76, %s77
      %p86 = scmp.eq.s32.totalorder %s19, 0
      %p87 = por %p85, %p86
      %p88 = scmp.ne.s32.totalorder %s76, %s77
      %p89 = scmp.eq.s32.totalorder %s20, 1
      %p90 = por %p88, %p89
      %p92 = scmp.ne.s32.totalorder %s77, %s91
      %p93 = scmp.eq.s32.totalorder %s20, 0
      %p94 = por %p92, %p93
      %s96 = sadd.s32 %s95, 1
      %p99 = scmp.eq.s32.totalorder %s14, 1
      %p100 = scmp.ne.s32.totalorder %s95, %s97
      %p101 = scmp.eq.s32.totalorder %s14, 0
      %p102 = por %p100, %p101
      %p103 = scmp.ne.s32.totalorder %s95, %s97
      %p104 = scmp.eq.s32.totalorder %s19, 1
      %p105 = por %p103, %p104
      %p106 = scmp.ne.s32.totalorder %s97, %s98
      %p107 = scmp.eq.s32.totalorder %s19, 0
      %p108 = por %p106, %p107
      %p109 = scmp.ne.s32.totalorder %s97, %s98
      %p110 = scmp.eq.s32.totalorder %s20, 1
      %p111 = por %p109, %p110
      %p113 = scmp.ne.s32.totalorder %s98, %s112
      %p114 = scmp.eq.s32.totalorder %s20, 0
      %p115 = por %p113, %p114
      %s117 = sadd.s32 %s116, 1
      %p120 = scmp.eq.s32.totalorder %s14, 1
      %p121 = scmp.ne.s32.totalorder %s116, %s118
      %p122 = scmp.eq.s32.totalorder %s14, 0
      %p123 = por %p121, %p122
      %p124 = scmp.ne.s32.totalorder %s116, %s118
      %p125 = scmp.eq.s32.totalorder %s19, 1
      %p126 = por %p124, %p125
      %p127 = scmp.ne.s32.totalorder %s118, %s119
      %p128 = scmp.eq.s32.totalorder %s19, 0
      %p129 = por %p127, %p128
      %p130 = scmp.ne.s32.totalorder %s118, %s119
      %p131 = scmp.eq.s32.totalorder %s20, 1
      %p132 = por %p130, %p131
      %p134 = scmp.ne.s32.totalorder %s119, %s133
      %p135 = scmp.eq.s32.totalorder %s20, 0
      %p136 = por %p134, %p135
      %s137 = ssub.s32 %s14, %s21
      %p138 = scmp.eq.s32.totalorder %s137, 0
      %s140 = sadd.s32 %s139, 1
      %s141 = scalar_select %p138, %s139, %s140
      %p144 = pneg %p138
      %p145 = scmp.eq.s32.totalorder %s14, 1
      %p146 = por %p144, %p145
      %p147 = scmp.ne.s32.totalorder %s139, %s142
      %p148 = scmp.eq.s32.totalorder %s14, 0
      %p149 = por %p147, %p148
      %p150 = scmp.ne.s32.totalorder %s139, %s142
      %p151 = scmp.eq.s32.totalorder %s19, 1
      %p152 = por %p150, %p151
      %p153 = scmp.ne.s32.totalorder %s142, %s143
      %p154 = scmp.eq.s32.totalorder %s19, 0
      %p155 = por %p153, %p154
      %p156 = scmp.ne.s32.totalorder %s142, %s143
      %p157 = scmp.eq.s32.totalorder %s20, 1
      %p158 = por %p156, %p157
      %p160 = scmp.ne.s32.totalorder %s143, %s159
      %p161 = scmp.eq.s32.totalorder %s20, 0
      %p162 = por %p160, %p161
      %p163 = scmp.le.s32.totalorder 1, %s14
      %p164 = scmp.lt.s32.totalorder %s14, 3
      %p165 = pnand %p163, %p164
      %p166 = pneg %p165
      // Predicated region
      $region9: #{tpu_custom_call.1} parent=5 // pred_check
        _
      $region10: #{tpu_custom_call.1} parent=5 // pred_check_branch
        %168 = sbr.rel (%p165) target = $region12
      $region11: #{tpu_custom_call.1} parent=5 // pred_region
        %s169 = ssub.s32 %s14, 1
        // Predicated region
        $region13: #{tpu_custom_call.1} parent=11 // pred_check
          %p170 = pneg %p87
        $region14: #{tpu_custom_call.1} parent=11 // pred_check_branch
          %172 = sbr.rel (%p170) target = $region16
        $region15: #{tpu_custom_call.1} parent=11 // pred_region
          _
        $region16: #{tpu_custom_call.1} parent=11 // pred_fallthru
          _
        // Predicated region
        $region17: #{tpu_custom_call.1} parent=11 // pred_check
          %p173 = pneg %p108
        $region18: #{tpu_custom_call.1} parent=11 // pred_check_branch
          %175 = sbr.rel (%p173) target = $region20
        $region19: #{tpu_custom_call.1} parent=11 // pred_region
          _
        $region20: #{tpu_custom_call.1} parent=11 // pred_fallthru
          _
        // Predicated region
        $region21: #{tpu_custom_call.1} parent=11 // pred_check
          %p176 = pneg %p129
        $region22: #{tpu_custom_call.1} parent=11 // pred_check_branch
          %178 = sbr.rel (%p176) target = $region24
        $region23: #{tpu_custom_call.1} parent=11 // pred_region
          _
        $region24: #{tpu_custom_call.1} parent=11 // pred_fallthru
          _
      $region12: #{tpu_custom_call.1} parent=5 // pred_fallthru
        _
      %p179 = scmp.lt.s32.totalorder %s14, 2
      // Predicated region
      $region25: #{tpu_custom_call.1} parent=5 // pred_check
        %p180 = pneg %p179
      $region26: #{tpu_custom_call.1} parent=5 // pred_check_branch
        %182 = sbr.rel (%p180) target = $region28
      $region27: #{tpu_custom_call.1} parent=5 // pred_region
        // Predicated region
        $region29: #{tpu_custom_call.1} parent=27 // pred_check
          %p183 = pneg %p34
        $region30: #{tpu_custom_call.1} parent=27 // pred_check_branch
          %185 = sbr.rel (%p183) target = $region32
        $region31: #{tpu_custom_call.1} parent=27 // pred_region
          %s186 = smul.u32 64, %s14
          %p187 = scmp.lt.s32.totalorder %s186, 191
          %s188 = scalar_select %p187, %s186, 191
          %s189 = smul.addr %s188, 4
          %s190 = scalar_lea.vmem %s0, %s189
          %s191 = smul.u32 64, %s14
        $region32: #{tpu_custom_call.1} parent=27 // pred_fallthru
          _
        // Predicated region
        $region33: #{tpu_custom_call.1} parent=27 // pred_check
          %p192 = pneg %p60
        $region34: #{tpu_custom_call.1} parent=27 // pred_check_branch
          %194 = sbr.rel (%p192) target = $region36
        $region35: #{tpu_custom_call.1} parent=27 // pred_region
          %p195 = scmp.lt.s32.totalorder %s14, 1
          %s196 = scalar_select %p195, %s14, 1
          %s197 = smul.addr %s196, 6
          %s198 = smul.addr %s197, 4
          %s199 = scalar_lea.vmem %s1, %s198
        $region36: #{tpu_custom_call.1} parent=27 // pred_fallthru
          _
      $region28: #{tpu_custom_call.1} parent=5 // pred_fallthru
        _
      %p200 = scmp.le.s32.totalorder 1, %s14
      %p201 = scmp.lt.s32.totalorder %s14, 3
      %p202 = pnand %p200, %p201
      %p203 = pneg %p202
      // Predicated region
      $region37: #{tpu_custom_call.1} parent=5 // pred_check
        _
      $region38: #{tpu_custom_call.1} parent=5 // pred_check_branch
        %205 = sbr.rel (%p202) target = $region40
      $region39: #{tpu_custom_call.1} parent=5 // pred_region
        %s206 = ssub.s32 %s14, 1
        %s207 = smul.u32 64, %s19
        %p208 = scmp.lt.s32.totalorder %s207, 191
        %s209 = scalar_select %p208, %s207, 191
        %s210 = smul.addr %s209, 4
        %s211 = scalar_lea.vmem %s0, %s210
        %p212 = pneg %p40
        %p213 = pneg %p37
        %p214 = scmp.lt.s32.totalorder %s19, 1
        %s215 = scalar_select %p214, %s19, 1
        %s216 = smul.addr %s215, 6
        %s217 = smul.addr %s216, 4
        %s218 = scalar_lea.vmem %s1, %s217
        %p219 = pneg %p66
        %p220 = pneg %p63
        %p221 = pneg %p87
        %p222 = pneg %p84
        %p223 = pneg %p108
        %p224 = pneg %p105
        %p225 = pneg %p129
        %p226 = pneg %p126
        %p227 = pneg %p155
        %p228 = pneg %p152
        %s229 = sand.u32 %s142, 1
        %s230 = scalar_lea.sflag [#allocation3], %s229
        %s231 = sand.u32 %s142, 1
        %s232 = smul.addr %s231, 256
        %s233 = scalar_lea.vmem [#allocation2], %s232
        %s234 = smul.u32 64, %s19
        %p235 = scmp.lt.s32.totalorder %s234, 191
        %s236 = scalar_select %p235, %s234, 191
        %s237 = smul.addr %s236, 4
        %s238 = scalar_lea.vmem %s0, %s237
        %s239 = smul.u32 64, %s19
        %p240 = scmp.lt.s32.totalorder %s19, 1
        %s241 = scalar_select %p240, %s19, 1
        %s242 = smul.addr %s241, 6
        %s243 = smul.addr %s242, 4
        %s244 = scalar_lea.vmem %s1, %s243
        %s245 = smul.u32 64, %s19
        %v247 = vld [vmem:[%s238] sm:$0xf]
        %v248 = vld [vmem:[%s238 + $0x4] sm:$0xf]
        %v249 = vld [vmem:[%s238 + $0x8] sm:$0xf]
        %v250 = vld [vmem:[%s238 + $0xc] sm:$0xf]
        %v251 = vld [vmem:[%s238 + $0x10] sm:$0xf]
        %v252 = vld [vmem:[%s238 + $0x14] sm:$0xf]
        %v253 = vld [vmem:[%s238 + $0x18] sm:$0xf]
        %v254 = vld [vmem:[%s238 + $0x1c] sm:$0xf]
        %v255 = vld [vmem:[%s238 + $0x20] sm:$0xf]
        %v256 = vld [vmem:[%s238 + $0x24] sm:$0xf]
        %v257 = vld [vmem:[%s238 + $0x28] sm:$0xf]
        %v258 = vld [vmem:[%s238 + $0x2c] sm:$0xf]
        %v259 = vld [vmem:[%s238 + $0x30] sm:$0xf]
        %v260 = vld [vmem:[%s238 + $0x34] sm:$0xf]
        %v261 = vld [vmem:[%s238 + $0x38] sm:$0xf]
        %v262 = vld [vmem:[%s238 + $0x3c] sm:$0xf]
        %v263 = vld [vmem:[%s238 + $0x40] sm:$0xf]
        %v264 = vld [vmem:[%s238 + $0x44] sm:$0xf]
        %v265 = vld [vmem:[%s238 + $0x48] sm:$0xf]
        %v266 = vld [vmem:[%s238 + $0x4c] sm:$0xf]
        %v267 = vld [vmem:[%s238 + $0x50] sm:$0xf]
        %v268 = vld [vmem:[%s238 + $0x54] sm:$0xf]
        %v269 = vld [vmem:[%s238 + $0x58] sm:$0xf]
        %v270 = vld [vmem:[%s238 + $0x5c] sm:$0xf]
        %v271 = vld [vmem:[%s238 + $0x60] sm:$0xf]
        %v272 = vld [vmem:[%s238 + $0x64] sm:$0xf]
        %v273 = vld [vmem:[%s238 + $0x68] sm:$0xf]
        %v274 = vld [vmem:[%s238 + $0x6c] sm:$0xf]
        %v275 = vld [vmem:[%s238 + $0x70] sm:$0xf]
        %v276 = vld [vmem:[%s238 + $0x74] sm:$0xf]
        %v277 = vld [vmem:[%s238 + $0x78] sm:$0xf]
        %v278 = vld [vmem:[%s238 + $0x7c] sm:$0xf]
        %v279 = vld [vmem:[%s238 + $0x80] sm:$0xf]
        %v280 = vld [vmem:[%s238 + $0x84] sm:$0xf]
        %v281 = vld [vmem:[%s238 + $0x88] sm:$0xf]
        %v282 = vld [vmem:[%s238 + $0x8c] sm:$0xf]
        %v283 = vld [vmem:[%s238 + $0x90] sm:$0xf]
        %v284 = vld [vmem:[%s238 + $0x94] sm:$0xf]
        %v285 = vld [vmem:[%s238 + $0x98] sm:$0xf]
        %v286 = vld [vmem:[%s238 + $0x9c] sm:$0xf]
        %v287 = vld [vmem:[%s238 + $0xa0] sm:$0xf]
        %v288 = vld [vmem:[%s238 + $0xa4] sm:$0xf]
        %v289 = vld [vmem:[%s238 + $0xa8] sm:$0xf]
        %v290 = vld [vmem:[%s238 + $0xac] sm:$0xf]
        %v291 = vld [vmem:[%s238 + $0xb0] sm:$0xf]
        %v292 = vld [vmem:[%s238 + $0xb4] sm:$0xf]
        %v293 = vld [vmem:[%s238 + $0xb8] sm:$0xf]
        %v294 = vld [vmem:[%s238 + $0xbc] sm:$0xf]
        %v295 = vld [vmem:[%s238 + $0xc0] sm:$0xf]
        %v296 = vld [vmem:[%s238 + $0xc4] sm:$0xf]
        %v297 = vld [vmem:[%s238 + $0xc8] sm:$0xf]
        %v298 = vld [vmem:[%s238 + $0xcc] sm:$0xf]
        %v299 = vld [vmem:[%s238 + $0xd0] sm:$0xf]
        %v300 = vld [vmem:[%s238 + $0xd4] sm:$0xf]
        %v301 = vld [vmem:[%s238 + $0xd8] sm:$0xf]
        %v302 = vld [vmem:[%s238 + $0xdc] sm:$0xf]
        %v303 = vld [vmem:[%s238 + $0xe0] sm:$0xf]
        %v304 = vld [vmem:[%s238 + $0xe4] sm:$0xf]
        %v305 = vld [vmem:[%s238 + $0xe8] sm:$0xf]
        %v306 = vld [vmem:[%s238 + $0xec] sm:$0xf]
        %v307 = vld [vmem:[%s238 + $0xf0] sm:$0xf]
        %v308 = vld [vmem:[%s238 + $0xf4] sm:$0xf]
        %v309 = vld [vmem:[%s238 + $0xf8] sm:$0xf]
        %v310 = vld [vmem:[%s238 + $0xfc] sm:$0xf]
        %v311 = vunpack.c.l.bf16 %v247
        %v312 = vunpack.c.l.bf16 %v248
        %v313 = vunpack.c.l.bf16 %v249
        %v314 = vunpack.c.l.bf16 %v250
        %v315 = vunpack.c.l.bf16 %v251
        %v316 = vunpack.c.l.bf16 %v252
        %v317 = vunpack.c.l.bf16 %v253
        %v318 = vunpack.c.l.bf16 %v254
        %v319 = vunpack.c.l.bf16 %v255
        %v320 = vunpack.c.l.bf16 %v256
        %v321 = vunpack.c.l.bf16 %v257
        %v322 = vunpack.c.l.bf16 %v258
        %v323 = vunpack.c.l.bf16 %v259
        %v324 = vunpack.c.l.bf16 %v260
        %v325 = vunpack.c.l.bf16 %v261
        %v326 = vunpack.c.l.bf16 %v262
        %v327 = vunpack.c.l.bf16 %v263
        %v328 = vunpack.c.l.bf16 %v264
        %v329 = vunpack.c.l.bf16 %v265
        %v330 = vunpack.c.l.bf16 %v266
        %v331 = vunpack.c.l.bf16 %v267
        %v332 = vunpack.c.l.bf16 %v268
        %v333 = vunpack.c.l.bf16 %v269
        %v334 = vunpack.c.l.bf16 %v270
        %v335 = vunpack.c.l.bf16 %v271
        %v336 = vunpack.c.l.bf16 %v272
        %v337 = vunpack.c.l.bf16 %v273
        %v338 = vunpack.c.l.bf16 %v274
        %v339 = vunpack.c.l.bf16 %v275
        %v340 = vunpack.c.l.bf16 %v276
        %v341 = vunpack.c.l.bf16 %v277
        %v342 = vunpack.c.l.bf16 %v278
        %v343 = vunpack.c.l.bf16 %v279
        %v344 = vunpack.c.l.bf16 %v280
        %v345 = vunpack.c.l.bf16 %v281
        %v346 = vunpack.c.l.bf16 %v282
        %v347 = vunpack.c.l.bf16 %v283
        %v348 = vunpack.c.l.bf16 %v284
        %v349 = vunpack.c.l.bf16 %v285
        %v350 = vunpack.c.l.bf16 %v286
        %v351 = vunpack.c.l.bf16 %v287
        %v352 = vunpack.c.l.bf16 %v288
        %v353 = vunpack.c.l.bf16 %v289
        %v354 = vunpack.c.l.bf16 %v290
        %v355 = vunpack.c.l.bf16 %v291
        %v356 = vunpack.c.l.bf16 %v292
        %v357 = vunpack.c.l.bf16 %v293
        %v358 = vunpack.c.l.bf16 %v294
        %v359 = vunpack.c.l.bf16 %v295
        %v360 = vunpack.c.l.bf16 %v296
        %v361 = vunpack.c.l.bf16 %v297
        %v362 = vunpack.c.l.bf16 %v298
        %v363 = vunpack.c.l.bf16 %v299
        %v364 = vunpack.c.l.bf16 %v300
        %v365 = vunpack.c.l.bf16 %v301
        %v366 = vunpack.c.l.bf16 %v302
        %v367 = vunpack.c.l.bf16 %v303
        %v368 = vunpack.c.l.bf16 %v304
        %v369 = vunpack.c.l.bf16 %v305
        %v370 = vunpack.c.l.bf16 %v306
        %v371 = vunpack.c.l.bf16 %v307
        %v372 = vunpack.c.l.bf16 %v308
        %v373 = vunpack.c.l.bf16 %v309
        %v374 = vunpack.c.l.bf16 %v310
        %v375 = vld [vmem:[%s244] sm:$0xf]
        %v376 = vld [vmem:[%s244 + $0x4] sm:$0xf]
        %v377 = vld [vmem:[%s244 + $0x8] sm:$0xf]
        %v378 = vld [vmem:[%s244 + $0xc] sm:$0xf]
        %v379 = vld [vmem:[%s244 + $0x10] sm:$0xf]
        %v380 = vunpack.c.l.bf16 %v375
        %v381 = vunpack.c.l.bf16 %v376
        %v382 = vunpack.c.l.bf16 %v377
        %v383 = vunpack.c.l.bf16 %v378
        %v384 = vunpack.c.l.bf16 %v379
        %vm454 = vcmask 1046528
        %v455 = vrot.slane %v311, 1
        %v456 = vrot.slane %v312, 1
        %v457 = vsel %vm454, %v455, %v456
        %v458 = vrot.slane %v313, 1
        %v459 = vsel %vm454, %v456, %v458
        %v460 = vrot.slane %v314, 1
        %v461 = vsel %vm454, %v458, %v460
        %v462 = vrot.slane %v315, 1
        %v463 = vsel %vm454, %v460, %v462
        %v464 = vrot.slane %v316, 1
        %v465 = vsel %vm454, %v462, %v464
        %v466 = vrot.slane %v317, 1
        %v467 = vsel %vm454, %v464, %v466
        %v468 = vrot.slane %v318, 1
        %v469 = vsel %vm454, %v466, %v468
        %v470 = vrot.slane %v319, 1
        %v471 = vsel %vm454, %v468, %v470
        %v472 = vrot.slane %v320, 1
        %v473 = vsel %vm454, %v470, %v472
        %v474 = vrot.slane %v321, 1
        %v475 = vsel %vm454, %v472, %v474
        %v476 = vrot.slane %v322, 1
        %v477 = vsel %vm454, %v474, %v476
        %v478 = vrot.slane %v323, 1
        %v479 = vsel %vm454, %v476, %v478
        %v480 = vrot.slane %v324, 1
        %v481 = vsel %vm454, %v478, %v480
        %v482 = vrot.slane %v325, 1
        %v483 = vsel %vm454, %v480, %v482
        %v484 = vrot.slane %v326, 1
        %v485 = vsel %vm454, %v482, %v484
        %v486 = vrot.slane %v327, 1
        %v487 = vsel %vm454, %v484, %v486
        %v488 = vrot.slane %v328, 1
        %v489 = vsel %vm454, %v486, %v488
        %v490 = vrot.slane %v329, 1
        %v491 = vsel %vm454, %v488, %v490
        %v492 = vrot.slane %v330, 1
        %v493 = vsel %vm454, %v490, %v492
        %v494 = vrot.slane %v331, 1
        %v495 = vsel %vm454, %v492, %v494
        %v496 = vrot.slane %v332, 1
        %v497 = vsel %vm454, %v494, %v496
        %v498 = vrot.slane %v333, 1
        %v499 = vsel %vm454, %v496, %v498
        %v500 = vrot.slane %v334, 1
        %v501 = vsel %vm454, %v498, %v500
        %v502 = vrot.slane %v335, 1
        %v503 = vsel %vm454, %v500, %v502
        %v504 = vrot.slane %v336, 1
        %v505 = vsel %vm454, %v502, %v504
        %v506 = vrot.slane %v337, 1
        %v507 = vsel %vm454, %v504, %v506
        %v508 = vrot.slane %v338, 1
        %v509 = vsel %vm454, %v506, %v508
        %v510 = vrot.slane %v339, 1
        %v511 = vsel %vm454, %v508, %v510
        %v512 = vrot.slane %v340, 1
        %v513 = vsel %vm454, %v510, %v512
        %v514 = vrot.slane %v341, 1
        %v515 = vsel %vm454, %v512, %v514
        %v516 = vrot.slane %v342, 1
        %v517 = vsel %vm454, %v514, %v516
        %v518 = vrot.slane %v343, 1
        %v519 = vsel %vm454, %v516, %v518
        %v520 = vrot.slane %v344, 1
        %v521 = vsel %vm454, %v518, %v520
        %v522 = vrot.slane %v345, 1
        %v523 = vsel %vm454, %v520, %v522
        %v524 = vrot.slane %v346, 1
        %v525 = vsel %vm454, %v522, %v524
        %v526 = vrot.slane %v347, 1
        %v527 = vsel %vm454, %v524, %v526
        %v528 = vrot.slane %v348, 1
        %v529 = vsel %vm454, %v526, %v528
        %v530 = vrot.slane %v349, 1
        %v531 = vsel %vm454, %v528, %v530
        %v532 = vrot.slane %v350, 1
        %v533 = vsel %vm454, %v530, %v532
        %v534 = vrot.slane %v351, 1
        %v535 = vsel %vm454, %v532, %v534
        %v536 = vrot.slane %v352, 1
        %v537 = vsel %vm454, %v534, %v536
        %v538 = vrot.slane %v353, 1
        %v539 = vsel %vm454, %v536, %v538
        %v540 = vrot.slane %v354, 1
        %v541 = vsel %vm454, %v538, %v540
        %v542 = vrot.slane %v355, 1
        %v543 = vsel %vm454, %v540, %v542
        %v544 = vrot.slane %v356, 1
        %v545 = vsel %vm454, %v542, %v544
        %v546 = vrot.slane %v357, 1
        %v547 = vsel %vm454, %v544, %v546
        %v548 = vrot.slane %v358, 1
        %v549 = vsel %vm454, %v546, %v548
        %v550 = vrot.slane %v359, 1
        %v551 = vsel %vm454, %v548, %v550
        %v552 = vrot.slane %v360, 1
        %v553 = vsel %vm454, %v550, %v552
        %v554 = vrot.slane %v361, 1
        %v555 = vsel %vm454, %v552, %v554
        %v556 = vrot.slane %v362, 1
        %v557 = vsel %vm454, %v554, %v556
        %v558 = vrot.slane %v363, 1
        %v559 = vsel %vm454, %v556, %v558
        %v560 = vrot.slane %v364, 1
        %v561 = vsel %vm454, %v558, %v560
        %v562 = vrot.slane %v365, 1
        %v563 = vsel %vm454, %v560, %v562
        %v564 = vrot.slane %v366, 1
        %v565 = vsel %vm454, %v562, %v564
        %v566 = vrot.slane %v367, 1
        %v567 = vsel %vm454, %v564, %v566
        %v568 = vrot.slane %v368, 1
        %v569 = vsel %vm454, %v566, %v568
        %v570 = vrot.slane %v369, 1
        %v571 = vsel %vm454, %v568, %v570
        %v572 = vrot.slane %v370, 1
        %v573 = vsel %vm454, %v570, %v572
        %v574 = vrot.slane %v371, 1
        %v575 = vsel %vm454, %v572, %v574
        %v576 = vrot.slane %v372, 1
        %v577 = vsel %vm454, %v574, %v576
        %v578 = vrot.slane %v373, 1
        %v579 = vsel %vm454, %v576, %v578
        %v580 = vrot.slane %v374, 1
        %v581 = vsel %vm454, %v578, %v580
        %v582 = vrot.slane %v380, 1
        %v583 = vsel %vm454, %v580, %v582
        %v584 = vrot.slane %v381, 1
        %v585 = vsel %vm454, %v582, %v584
        %v586 = vrot.slane %v382, 1
        %v587 = vsel %vm454, %v584, %v586
        %v588 = vrot.slane %v383, 1
        %v589 = vsel %vm454, %v586, %v588
        %v590 = vrot.slane %v384, 1
        %v591 = vsel %vm454, %v588, %v590
        %592 = vrot.lane.b32.xlu0 %v457, 4
        %v593 = vpop.permute.xlu0 %592
        %594 = vrot.lane.b32.xlu0 %v459, 4
        %v595 = vpop.permute.xlu0 %594
        %596 = vrot.lane.b32.xlu0 %v461, 4
        %v597 = vpop.permute.xlu0 %596
        %598 = vrot.lane.b32.xlu0 %v463, 4
        %v599 = vpop.permute.xlu0 %598
        %600 = vrot.lane.b32.xlu0 %v465, 4
        %v601 = vpop.permute.xlu0 %600
        %602 = vrot.lane.b32.xlu0 %v467, 4
        %v603 = vpop.permute.xlu0 %602
        %604 = vrot.lane.b32.xlu0 %v469, 4
        %v605 = vpop.permute.xlu0 %604
        %606 = vrot.lane.b32.xlu0 %v471, 4
        %v607 = vpop.permute.xlu0 %606
        %608 = vrot.lane.b32.xlu0 %v473, 4
        %v609 = vpop.permute.xlu0 %608
        %610 = vrot.lane.b32.xlu0 %v475, 4
        %v611 = vpop.permute.xlu0 %610
        %612 = vrot.lane.b32.xlu0 %v477, 4
        %v613 = vpop.permute.xlu0 %612
        %614 = vrot.lane.b32.xlu0 %v479, 4
        %v615 = vpop.permute.xlu0 %614
        %616 = vrot.lane.b32.xlu0 %v481, 4
        %v617 = vpop.permute.xlu0 %616
        %618 = vrot.lane.b32.xlu0 %v483, 4
        %v619 = vpop.permute.xlu0 %618
        %620 = vrot.lane.b32.xlu0 %v485, 4
        %v621 = vpop.permute.xlu0 %620
        %622 = vrot.lane.b32.xlu0 %v487, 4
        %v623 = vpop.permute.xlu0 %622
        %624 = vrot.lane.b32.xlu0 %v489, 4
        %v625 = vpop.permute.xlu0 %624
        %626 = vrot.lane.b32.xlu0 %v491, 4
        %v627 = vpop.permute.xlu0 %626
        %628 = vrot.lane.b32.xlu0 %v493, 4
        %v629 = vpop.permute.xlu0 %628
        %630 = vrot.lane.b32.xlu0 %v495, 4
        %v631 = vpop.permute.xlu0 %630
        %632 = vrot.lane.b32.xlu0 %v497, 4
        %v633 = vpop.permute.xlu0 %632
        %634 = vrot.lane.b32.xlu0 %v499, 4
        %v635 = vpop.permute.xlu0 %634
        %636 = vrot.lane.b32.xlu0 %v501, 4
        %v637 = vpop.permute.xlu0 %636
        %638 = vrot.lane.b32.xlu0 %v503, 4
        %v639 = vpop.permute.xlu0 %638
        %640 = vrot.lane.b32.xlu0 %v505, 4
        %v641 = vpop.permute.xlu0 %640
        %642 = vrot.lane.b32.xlu0 %v507, 4
        %v643 = vpop.permute.xlu0 %642
        %644 = vrot.lane.b32.xlu0 %v509, 4
        %v645 = vpop.permute.xlu0 %644
        %646 = vrot.lane.b32.xlu0 %v511, 4
        %v647 = vpop.permute.xlu0 %646
        %648 = vrot.lane.b32.xlu0 %v513, 4
        %v649 = vpop.permute.xlu0 %648
        %650 = vrot.lane.b32.xlu0 %v515, 4
        %v651 = vpop.permute.xlu0 %650
        %652 = vrot.lane.b32.xlu0 %v517, 4
        %v653 = vpop.permute.xlu0 %652
        %654 = vrot.lane.b32.xlu0 %v519, 4
        %v655 = vpop.permute.xlu0 %654
        %656 = vrot.lane.b32.xlu0 %v521, 4
        %v657 = vpop.permute.xlu0 %656
        %658 = vrot.lane.b32.xlu0 %v523, 4
        %v659 = vpop.permute.xlu0 %658
        %660 = vrot.lane.b32.xlu0 %v525, 4
        %v661 = vpop.permute.xlu0 %660
        %662 = vrot.lane.b32.xlu0 %v527, 4
        %v663 = vpop.permute.xlu0 %662
        %664 = vrot.lane.b32.xlu0 %v529, 4
        %v665 = vpop.permute.xlu0 %664
        %666 = vrot.lane.b32.xlu0 %v531, 4
        %v667 = vpop.permute.xlu0 %666
        %668 = vrot.lane.b32.xlu0 %v533, 4
        %v669 = vpop.permute.xlu0 %668
        %670 = vrot.lane.b32.xlu0 %v535, 4
        %v671 = vpop.permute.xlu0 %670
        %672 = vrot.lane.b32.xlu0 %v537, 4
        %v673 = vpop.permute.xlu0 %672
        %674 = vrot.lane.b32.xlu0 %v539, 4
        %v675 = vpop.permute.xlu0 %674
        %676 = vrot.lane.b32.xlu0 %v541, 4
        %v677 = vpop.permute.xlu0 %676
        %678 = vrot.lane.b32.xlu0 %v543, 4
        %v679 = vpop.permute.xlu0 %678
        %680 = vrot.lane.b32.xlu0 %v545, 4
        %v681 = vpop.permute.xlu0 %680
        %682 = vrot.lane.b32.xlu0 %v547, 4
        %v683 = vpop.permute.xlu0 %682
        %684 = vrot.lane.b32.xlu0 %v549, 4
        %v685 = vpop.permute.xlu0 %684
        %686 = vrot.lane.b32.xlu0 %v551, 4
        %v687 = vpop.permute.xlu0 %686
        %688 = vrot.lane.b32.xlu0 %v553, 4
        %v689 = vpop.permute.xlu0 %688
        %690 = vrot.lane.b32.xlu0 %v555, 4
        %v691 = vpop.permute.xlu0 %690
        %692 = vrot.lane.b32.xlu0 %v557, 4
        %v693 = vpop.permute.xlu0 %692
        %694 = vrot.lane.b32.xlu0 %v559, 4
        %v695 = vpop.permute.xlu0 %694
        %696 = vrot.lane.b32.xlu0 %v561, 4
        %v697 = vpop.permute.xlu0 %696
        %698 = vrot.lane.b32.xlu0 %v563, 4
        %v699 = vpop.permute.xlu0 %698
        %700 = vrot.lane.b32.xlu0 %v565, 4
        %v701 = vpop.permute.xlu0 %700
        %702 = vrot.lane.b32.xlu0 %v567, 4
        %v703 = vpop.permute.xlu0 %702
        %704 = vrot.lane.b32.xlu0 %v569, 4
        %v705 = vpop.permute.xlu0 %704
        %706 = vrot.lane.b32.xlu0 %v571, 4
        %v707 = vpop.permute.xlu0 %706
        %708 = vrot.lane.b32.xlu0 %v573, 4
        %v709 = vpop.permute.xlu0 %708
        %710 = vrot.lane.b32.xlu0 %v575, 4
        %v711 = vpop.permute.xlu0 %710
        %712 = vrot.lane.b32.xlu0 %v577, 4
        %v713 = vpop.permute.xlu0 %712
        %714 = vrot.lane.b32.xlu0 %v579, 4
        %v715 = vpop.permute.xlu0 %714
        %716 = vrot.lane.b32.xlu0 %v581, 4
        %v717 = vpop.permute.xlu0 %716
        %718 = vrot.lane.b32.xlu0 %v583, 4
        %v719 = vpop.permute.xlu0 %718
        %720 = vrot.lane.b32.xlu0 %v585, 4
        %v721 = vpop.permute.xlu0 %720
        %722 = vrot.lane.b32.xlu0 %v587, 4
        %v723 = vpop.permute.xlu0 %722
        %724 = vrot.lane.b32.xlu0 %v589, 4
        %v725 = vpop.permute.xlu0 %724
        %726 = vrot.lane.b32.xlu0 %v591, 4
        %v727 = vpop.permute.xlu0 %726
        %728 = vrot.lane.b32.xlu0 %v590, 4
        %v729 = vpop.permute.xlu0 %728
        %vm799 = vcmask 1045504
        %v800 = vrot.slane %v311, 2
        %v801 = vrot.slane %v312, 2
        %v802 = vsel %vm799, %v800, %v801
        %v803 = vrot.slane %v313, 2
        %v804 = vsel %vm799, %v801, %v803
        %v805 = vrot.slane %v314, 2
        %v806 = vsel %vm799, %v803, %v805
        %v807 = vrot.slane %v315, 2
        %v808 = vsel %vm799, %v805, %v807
        %v809 = vrot.slane %v316, 2
        %v810 = vsel %vm799, %v807, %v809
        %v811 = vrot.slane %v317, 2
        %v812 = vsel %vm799, %v809, %v811
        %v813 = vrot.slane %v318, 2
        %v814 = vsel %vm799, %v811, %v813
        %v815 = vrot.slane %v319, 2
        %v816 = vsel %vm799, %v813, %v815
        %v817 = vrot.slane %v320, 2
        %v818 = vsel %vm799, %v815, %v817
        %v819 = vrot.slane %v321, 2
        %v820 = vsel %vm799, %v817, %v819
        %v821 = vrot.slane %v322, 2
        %v822 = vsel %vm799, %v819, %v821
        %v823 = vrot.slane %v323, 2
        %v824 = vsel %vm799, %v821, %v823
        %v825 = vrot.slane %v324, 2
        %v826 = vsel %vm799, %v823, %v825
        %v827 = vrot.slane %v325, 2
        %v828 = vsel %vm799, %v825, %v827
        %v829 = vrot.slane %v326, 2
        %v830 = vsel %vm799, %v827, %v829
        %v831 = vrot.slane %v327, 2
        %v832 = vsel %vm799, %v829, %v831
        %v833 = vrot.slane %v328, 2
        %v834 = vsel %vm799, %v831, %v833
        %v835 = vrot.slane %v329, 2
        %v836 = vsel %vm799, %v833, %v835
        %v837 = vrot.slane %v330, 2
        %v838 = vsel %vm799, %v835, %v837
        %v839 = vrot.slane %v331, 2
        %v840 = vsel %vm799, %v837, %v839
        %v841 = vrot.slane %v332, 2
        %v842 = vsel %vm799, %v839, %v841
        %v843 = vrot.slane %v333, 2
        %v844 = vsel %vm799, %v841, %v843
        %v845 = vrot.slane %v334, 2
        %v846 = vsel %vm799, %v843, %v845
        %v847 = vrot.slane %v335, 2
        %v848 = vsel %vm799, %v845, %v847
        %v849 = vrot.slane %v336, 2
        %v850 = vsel %vm799, %v847, %v849
        %v851 = vrot.slane %v337, 2
        %v852 = vsel %vm799, %v849, %v851
        %v853 = vrot.slane %v338, 2
        %v854 = vsel %vm799, %v851, %v853
        %v855 = vrot.slane %v339, 2
        %v856 = vsel %vm799, %v853, %v855
        %v857 = vrot.slane %v340, 2
        %v858 = vsel %vm799, %v855, %v857
        %v859 = vrot.slane %v341, 2
        %v860 = vsel %vm799, %v857, %v859
        %v861 = vrot.slane %v342, 2
        %v862 = vsel %vm799, %v859, %v861
        %v863 = vrot.slane %v343, 2
        %v864 = vsel %vm799, %v861, %v863
        %v865 = vrot.slane %v344, 2
        %v866 = vsel %vm799, %v863, %v865
        %v867 = vrot.slane %v345, 2
        %v868 = vsel %vm799, %v865, %v867
        %v869 = vrot.slane %v346, 2
        %v870 = vsel %vm799, %v867, %v869
        %v871 = vrot.slane %v347, 2
        %v872 = vsel %vm799, %v869, %v871
        %v873 = vrot.slane %v348, 2
        %v874 = vsel %vm799, %v871, %v873
        %v875 = vrot.slane %v349, 2
        %v876 = vsel %vm799, %v873, %v875
        %v877 = vrot.slane %v350, 2
        %v878 = vsel %vm799, %v875, %v877
        %v879 = vrot.slane %v351, 2
        %v880 = vsel %vm799, %v877, %v879
        %v881 = vrot.slane %v352, 2
        %v882 = vsel %vm799, %v879, %v881
        %v883 = vrot.slane %v353, 2
        %v884 = vsel %vm799, %v881, %v883
        %v885 = vrot.slane %v354, 2
        %v886 = vsel %vm799, %v883, %v885
        %v887 = vrot.slane %v355, 2
        %v888 = vsel %vm799, %v885, %v887
        %v889 = vrot.slane %v356, 2
        %v890 = vsel %vm799, %v887, %v889
        %v891 = vrot.slane %v357, 2
        %v892 = vsel %vm799, %v889, %v891
        %v893 = vrot.slane %v358, 2
        %v894 = vsel %vm799, %v891, %v893
        %v895 = vrot.slane %v359, 2
        %v896 = vsel %vm799, %v893, %v895
        %v897 = vrot.slane %v360, 2
        %v898 = vsel %vm799, %v895, %v897
        %v899 = vrot.slane %v361, 2
        %v900 = vsel %vm799, %v897, %v899
        %v901 = vrot.slane %v362, 2
        %v902 = vsel %vm799, %v899, %v901
        %v903 = vrot.slane %v363, 2
        %v904 = vsel %vm799, %v901, %v903
        %v905 = vrot.slane %v364, 2
        %v906 = vsel %vm799, %v903, %v905
        %v907 = vrot.slane %v365, 2
        %v908 = vsel %vm799, %v905, %v907
        %v909 = vrot.slane %v366, 2
        %v910 = vsel %vm799, %v907, %v909
        %v911 = vrot.slane %v367, 2
        %v912 = vsel %vm799, %v909, %v911
        %v913 = vrot.slane %v368, 2
        %v914 = vsel %vm799, %v911, %v913
        %v915 = vrot.slane %v369, 2
        %v916 = vsel %vm799, %v913, %v915
        %v917 = vrot.slane %v370, 2
        %v918 = vsel %vm799, %v915, %v917
        %v919 = vrot.slane %v371, 2
        %v920 = vsel %vm799, %v917, %v919
        %v921 = vrot.slane %v372, 2
        %v922 = vsel %vm799, %v919, %v921
        %v923 = vrot.slane %v373, 2
        %v924 = vsel %vm799, %v921, %v923
        %v925 = vrot.slane %v374, 2
        %v926 = vsel %vm799, %v923, %v925
        %v927 = vrot.slane %v380, 2
        %v928 = vsel %vm799, %v925, %v927
        %v929 = vrot.slane %v381, 2
        %v930 = vsel %vm799, %v927, %v929
        %v931 = vrot.slane %v382, 2
        %v932 = vsel %vm799, %v929, %v931
        %v933 = vrot.slane %v383, 2
        %v934 = vsel %vm799, %v931, %v933
        %v935 = vrot.slane %v384, 2
        %v936 = vsel %vm799, %v933, %v935
        %937 = vrot.lane.b32.xlu0 %v802, 8
        %v938 = vpop.permute.xlu0 %937
        %939 = vrot.lane.b32.xlu0 %v804, 8
        %v940 = vpop.permute.xlu0 %939
        %941 = vrot.lane.b32.xlu0 %v806, 8
        %v942 = vpop.permute.xlu0 %941
        %943 = vrot.lane.b32.xlu0 %v808, 8
        %v944 = vpop.permute.xlu0 %943
        %945 = vrot.lane.b32.xlu0 %v810, 8
        %v946 = vpop.permute.xlu0 %945
        %947 = vrot.lane.b32.xlu0 %v812, 8
        %v948 = vpop.permute.xlu0 %947
        %949 = vrot.lane.b32.xlu0 %v814, 8
        %v950 = vpop.permute.xlu0 %949
        %951 = vrot.lane.b32.xlu0 %v816, 8
        %v952 = vpop.permute.xlu0 %951
        %953 = vrot.lane.b32.xlu0 %v818, 8
        %v954 = vpop.permute.xlu0 %953
        %955 = vrot.lane.b32.xlu0 %v820, 8
        %v956 = vpop.permute.xlu0 %955
        %957 = vrot.lane.b32.xlu0 %v822, 8
        %v958 = vpop.permute.xlu0 %957
        %959 = vrot.lane.b32.xlu0 %v824, 8
        %v960 = vpop.permute.xlu0 %959
        %961 = vrot.lane.b32.xlu0 %v826, 8
        %v962 = vpop.permute.xlu0 %961
        %963 = vrot.lane.b32.xlu0 %v828, 8
        %v964 = vpop.permute.xlu0 %963
        %965 = vrot.lane.b32.xlu0 %v830, 8
        %v966 = vpop.permute.xlu0 %965
        %967 = vrot.lane.b32.xlu0 %v832, 8
        %v968 = vpop.permute.xlu0 %967
        %969 = vrot.lane.b32.xlu0 %v834, 8
        %v970 = vpop.permute.xlu0 %969
        %971 = vrot.lane.b32.xlu0 %v836, 8
        %v972 = vpop.permute.xlu0 %971
        %973 = vrot.lane.b32.xlu0 %v838, 8
        %v974 = vpop.permute.xlu0 %973
        %975 = vrot.lane.b32.xlu0 %v840, 8
        %v976 = vpop.permute.xlu0 %975
        %977 = vrot.lane.b32.xlu0 %v842, 8
        %v978 = vpop.permute.xlu0 %977
        %979 = vrot.lane.b32.xlu0 %v844, 8
        %v980 = vpop.permute.xlu0 %979
        %981 = vrot.lane.b32.xlu0 %v846, 8
        %v982 = vpop.permute.xlu0 %981
        %983 = vrot.lane.b32.xlu0 %v848, 8
        %v984 = vpop.permute.xlu0 %983
        %985 = vrot.lane.b32.xlu0 %v850, 8
        %v986 = vpop.permute.xlu0 %985
        %987 = vrot.lane.b32.xlu0 %v852, 8
        %v988 = vpop.permute.xlu0 %987
        %989 = vrot.lane.b32.xlu0 %v854, 8
        %v990 = vpop.permute.xlu0 %989
        %991 = vrot.lane.b32.xlu0 %v856, 8
        %v992 = vpop.permute.xlu0 %991
        %993 = vrot.lane.b32.xlu0 %v858, 8
        %v994 = vpop.permute.xlu0 %993
        %995 = vrot.lane.b32.xlu0 %v860, 8
        %v996 = vpop.permute.xlu0 %995
        %997 = vrot.lane.b32.xlu0 %v862, 8
        %v998 = vpop.permute.xlu0 %997
        %999 = vrot.lane.b32.xlu0 %v864, 8
        %v1000 = vpop.permute.xlu0 %999
        %1001 = vrot.lane.b32.xlu0 %v866, 8
        %v1002 = vpop.permute.xlu0 %1001
        %1003 = vrot.lane.b32.xlu0 %v868, 8
        %v1004 = vpop.permute.xlu0 %1003
        %1005 = vrot.lane.b32.xlu0 %v870, 8
        %v1006 = vpop.permute.xlu0 %1005
        %1007 = vrot.lane.b32.xlu0 %v872, 8
        %v1008 = vpop.permute.xlu0 %1007
        %1009 = vrot.lane.b32.xlu0 %v874, 8
        %v1010 = vpop.permute.xlu0 %1009
        %1011 = vrot.lane.b32.xlu0 %v876, 8
        %v1012 = vpop.permute.xlu0 %1011
        %1013 = vrot.lane.b32.xlu0 %v878, 8
        %v1014 = vpop.permute.xlu0 %1013
        %1015 = vrot.lane.b32.xlu0 %v880, 8
        %v1016 = vpop.permute.xlu0 %1015
        %1017 = vrot.lane.b32.xlu0 %v882, 8
        %v1018 = vpop.permute.xlu0 %1017
        %1019 = vrot.lane.b32.xlu0 %v884, 8
        %v1020 = vpop.permute.xlu0 %1019
        %1021 = vrot.lane.b32.xlu0 %v886, 8
        %v1022 = vpop.permute.xlu0 %1021
        %1023 = vrot.lane.b32.xlu0 %v888, 8
        %v1024 = vpop.permute.xlu0 %1023
        %1025 = vrot.lane.b32.xlu0 %v890, 8
        %v1026 = vpop.permute.xlu0 %1025
        %1027 = vrot.lane.b32.xlu0 %v892, 8
        %v1028 = vpop.permute.xlu0 %1027
        %1029 = vrot.lane.b32.xlu0 %v894, 8
        %v1030 = vpop.permute.xlu0 %1029
        %1031 = vrot.lane.b32.xlu0 %v896, 8
        %v1032 = vpop.permute.xlu0 %1031
        %1033 = vrot.lane.b32.xlu0 %v898, 8
        %v1034 = vpop.permute.xlu0 %1033
        %1035 = vrot.lane.b32.xlu0 %v900, 8
        %v1036 = vpop.permute.xlu0 %1035
        %1037 = vrot.lane.b32.xlu0 %v902, 8
        %v1038 = vpop.permute.xlu0 %1037
        %1039 = vrot.lane.b32.xlu0 %v904, 8
        %v1040 = vpop.permute.xlu0 %1039
        %1041 = vrot.lane.b32.xlu0 %v906, 8
        %v1042 = vpop.permute.xlu0 %1041
        %1043 = vrot.lane.b32.xlu0 %v908, 8
        %v1044 = vpop.permute.xlu0 %1043
        %1045 = vrot.lane.b32.xlu0 %v910, 8
        %v1046 = vpop.permute.xlu0 %1045
        %1047 = vrot.lane.b32.xlu0 %v912, 8
        %v1048 = vpop.permute.xlu0 %1047
        %1049 = vrot.lane.b32.xlu0 %v914, 8
        %v1050 = vpop.permute.xlu0 %1049
        %1051 = vrot.lane.b32.xlu0 %v916, 8
        %v1052 = vpop.permute.xlu0 %1051
        %1053 = vrot.lane.b32.xlu0 %v918, 8
        %v1054 = vpop.permute.xlu0 %1053
        %1055 = vrot.lane.b32.xlu0 %v920, 8
        %v1056 = vpop.permute.xlu0 %1055
        %1057 = vrot.lane.b32.xlu0 %v922, 8
        %v1058 = vpop.permute.xlu0 %1057
        %1059 = vrot.lane.b32.xlu0 %v924, 8
        %v1060 = vpop.permute.xlu0 %1059
        %1061 = vrot.lane.b32.xlu0 %v926, 8
        %v1062 = vpop.permute.xlu0 %1061
        %1063 = vrot.lane.b32.xlu0 %v928, 8
        %v1064 = vpop.permute.xlu0 %1063
        %1065 = vrot.lane.b32.xlu0 %v930, 8
        %v1066 = vpop.permute.xlu0 %1065
        %1067 = vrot.lane.b32.xlu0 %v932, 8
        %v1068 = vpop.permute.xlu0 %1067
        %1069 = vrot.lane.b32.xlu0 %v934, 8
        %v1070 = vpop.permute.xlu0 %1069
        %1071 = vrot.lane.b32.xlu0 %v936, 8
        %v1072 = vpop.permute.xlu0 %1071
        %1073 = vrot.lane.b32.xlu0 %v935, 8
        %v1074 = vpop.permute.xlu0 %1073
        %vm1144 = vcmask 31744
        %v1145 = vsel %vm1144, %v311, %v593
        %v1146 = vsel %vm1144, %v312, %v595
        %v1147 = vsel %vm1144, %v313, %v597
        %v1148 = vsel %vm1144, %v314, %v599
        %v1149 = vsel %vm1144, %v315, %v601
        %v1150 = vsel %vm1144, %v316, %v603
        %v1151 = vsel %vm1144, %v317, %v605
        %v1152 = vsel %vm1144, %v318, %v607
        %v1153 = vsel %vm1144, %v319, %v609
        %v1154 = vsel %vm1144, %v320, %v611
        %v1155 = vsel %vm1144, %v321, %v613
        %v1156 = vsel %vm1144, %v322, %v615
        %v1157 = vsel %vm1144, %v323, %v617
        %v1158 = vsel %vm1144, %v324, %v619
        %v1159 = vsel %vm1144, %v325, %v621
        %v1160 = vsel %vm1144, %v326, %v623
        %v1161 = vsel %vm1144, %v327, %v625
        %v1162 = vsel %vm1144, %v328, %v627
        %v1163 = vsel %vm1144, %v329, %v629
        %v1164 = vsel %vm1144, %v330, %v631
        %v1165 = vsel %vm1144, %v331, %v633
        %v1166 = vsel %vm1144, %v332, %v635
        %v1167 = vsel %vm1144, %v333, %v637
        %v1168 = vsel %vm1144, %v334, %v639
        %v1169 = vsel %vm1144, %v335, %v641
        %v1170 = vsel %vm1144, %v336, %v643
        %v1171 = vsel %vm1144, %v337, %v645
        %v1172 = vsel %vm1144, %v338, %v647
        %v1173 = vsel %vm1144, %v339, %v649
        %v1174 = vsel %vm1144, %v340, %v651
        %v1175 = vsel %vm1144, %v341, %v653
        %v1176 = vsel %vm1144, %v342, %v655
        %v1177 = vsel %vm1144, %v343, %v657
        %v1178 = vsel %vm1144, %v344, %v659
        %v1179 = vsel %vm1144, %v345, %v661
        %v1180 = vsel %vm1144, %v346, %v663
        %v1181 = vsel %vm1144, %v347, %v665
        %v1182 = vsel %vm1144, %v348, %v667
        %v1183 = vsel %vm1144, %v349, %v669
        %v1184 = vsel %vm1144, %v350, %v671
        %v1185 = vsel %vm1144, %v351, %v673
        %v1186 = vsel %vm1144, %v352, %v675
        %v1187 = vsel %vm1144, %v353, %v677
        %v1188 = vsel %vm1144, %v354, %v679
        %v1189 = vsel %vm1144, %v355, %v681
        %v1190 = vsel %vm1144, %v356, %v683
        %v1191 = vsel %vm1144, %v357, %v685
        %v1192 = vsel %vm1144, %v358, %v687
        %v1193 = vsel %vm1144, %v359, %v689
        %v1194 = vsel %vm1144, %v360, %v691
        %v1195 = vsel %vm1144, %v361, %v693
        %v1196 = vsel %vm1144, %v362, %v695
        %v1197 = vsel %vm1144, %v363, %v697
        %v1198 = vsel %vm1144, %v364, %v699
        %v1199 = vsel %vm1144, %v365, %v701
        %v1200 = vsel %vm1144, %v366, %v703
        %v1201 = vsel %vm1144, %v367, %v705
        %v1202 = vsel %vm1144, %v368, %v707
        %v1203 = vsel %vm1144, %v369, %v709
        %v1204 = vsel %vm1144, %v370, %v711
        %v1205 = vsel %vm1144, %v371, %v713
        %v1206 = vsel %vm1144, %v372, %v715
        %v1207 = vsel %vm1144, %v373, %v717
        %v1208 = vsel %vm1144, %v374, %v719
        %v1209 = vsel %vm1144, %v380, %v721
        %v1210 = vsel %vm1144, %v381, %v723
        %v1211 = vsel %vm1144, %v382, %v725
        %v1212 = vsel %vm1144, %v383, %v727
        %v1213 = vsel %vm1144, %v384, %v729
        %vm1214 = vcmask 64512
        %v1215 = vsel %vm1214, %v1145, %v938
        %v1216 = vsel %vm1214, %v1146, %v940
        %v1217 = vsel %vm1214, %v1147, %v942
        %v1218 = vsel %vm1214, %v1148, %v944
        %v1219 = vsel %vm1214, %v1149, %v946
        %v1220 = vsel %vm1214, %v1150, %v948
        %v1221 = vsel %vm1214, %v1151, %v950
        %v1222 = vsel %vm1214, %v1152, %v952
        %v1223 = vsel %vm1214, %v1153, %v954
        %v1224 = vsel %vm1214, %v1154, %v956
        %v1225 = vsel %vm1214, %v1155, %v958
        %v1226 = vsel %vm1214, %v1156, %v960
        %v1227 = vsel %vm1214, %v1157, %v962
        %v1228 = vsel %vm1214, %v1158, %v964
        %v1229 = vsel %vm1214, %v1159, %v966
        %v1230 = vsel %vm1214, %v1160, %v968
        %v1231 = vsel %vm1214, %v1161, %v970
        %v1232 = vsel %vm1214, %v1162, %v972
        %v1233 = vsel %vm1214, %v1163, %v974
        %v1234 = vsel %vm1214, %v1164, %v976
        %v1235 = vsel %vm1214, %v1165, %v978
        %v1236 = vsel %vm1214, %v1166, %v980
        %v1237 = vsel %vm1214, %v1167, %v982
        %v1238 = vsel %vm1214, %v1168, %v984
        %v1239 = vsel %vm1214, %v1169, %v986
        %v1240 = vsel %vm1214, %v1170, %v988
        %v1241 = vsel %vm1214, %v1171, %v990
        %v1242 = vsel %vm1214, %v1172, %v992
        %v1243 = vsel %vm1214, %v1173, %v994
        %v1244 = vsel %vm1214, %v1174, %v996
        %v1245 = vsel %vm1214, %v1175, %v998
        %v1246 = vsel %vm1214, %v1176, %v1000
        %v1247 = vsel %vm1214, %v1177, %v1002
        %v1248 = vsel %vm1214, %v1178, %v1004
        %v1249 = vsel %vm1214, %v1179, %v1006
        %v1250 = vsel %vm1214, %v1180, %v1008
        %v1251 = vsel %vm1214, %v1181, %v1010
        %v1252 = vsel %vm1214, %v1182, %v1012
        %v1253 = vsel %vm1214, %v1183, %v1014
        %v1254 = vsel %vm1214, %v1184, %v1016
        %v1255 = vsel %vm1214, %v1185, %v1018
        %v1256 = vsel %vm1214, %v1186, %v1020
        %v1257 = vsel %vm1214, %v1187, %v1022
        %v1258 = vsel %vm1214, %v1188, %v1024
        %v1259 = vsel %vm1214, %v1189, %v1026
        %v1260 = vsel %vm1214, %v1190, %v1028
        %v1261 = vsel %vm1214, %v1191, %v1030
        %v1262 = vsel %vm1214, %v1192, %v1032
        %v1263 = vsel %vm1214, %v1193, %v1034
        %v1264 = vsel %vm1214, %v1194, %v1036
        %v1265 = vsel %vm1214, %v1195, %v1038
        %v1266 = vsel %vm1214, %v1196, %v1040
        %v1267 = vsel %vm1214, %v1197, %v1042
        %v1268 = vsel %vm1214, %v1198, %v1044
        %v1269 = vsel %vm1214, %v1199, %v1046
        %v1270 = vsel %vm1214, %v1200, %v1048
        %v1271 = vsel %vm1214, %v1201, %v1050
        %v1272 = vsel %vm1214, %v1202, %v1052
        %v1273 = vsel %vm1214, %v1203, %v1054
        %v1274 = vsel %vm1214, %v1204, %v1056
        %v1275 = vsel %vm1214, %v1205, %v1058
        %v1276 = vsel %vm1214, %v1206, %v1060
        %v1277 = vsel %vm1214, %v1207, %v1062
        %v1278 = vsel %vm1214, %v1208, %v1064
        %v1279 = vsel %vm1214, %v1209, %v1066
        %v1280 = vsel %vm1214, %v1210, %v1068
        %v1281 = vsel %vm1214, %v1211, %v1070
        %v1282 = vsel %vm1214, %v1212, %v1072
        %v1283 = vsel %vm1214, %v1213, %v1074
        %v1284 = vpack.c.bf16 %v1216, %v1215
        %v1285 = vpack.c.bf16 %v1218, %v1217
        %v1286 = vpack.c.bf16 %v1220, %v1219
        %v1287 = vpack.c.bf16 %v1222, %v1221
        %v1288 = vpack.c.bf16 %v1224, %v1223
        %v1289 = vpack.c.bf16 %v1226, %v1225
        %v1290 = vpack.c.bf16 %v1228, %v1227
        %v1291 = vpack.c.bf16 %v1230, %v1229
        %v1292 = vpack.c.bf16 %v1232, %v1231
        %v1293 = vpack.c.bf16 %v1234, %v1233
        %v1294 = vpack.c.bf16 %v1236, %v1235
        %v1295 = vpack.c.bf16 %v1238, %v1237
        %v1296 = vpack.c.bf16 %v1240, %v1239
        %v1297 = vpack.c.bf16 %v1242, %v1241
        %v1298 = vpack.c.bf16 %v1244, %v1243
        %v1299 = vpack.c.bf16 %v1246, %v1245
        %v1300 = vpack.c.bf16 %v1248, %v1247
        %v1301 = vpack.c.bf16 %v1250, %v1249
        %v1302 = vpack.c.bf16 %v1252, %v1251
        %v1303 = vpack.c.bf16 %v1254, %v1253
        %v1304 = vpack.c.bf16 %v1256, %v1255
        %v1305 = vpack.c.bf16 %v1258, %v1257
        %v1306 = vpack.c.bf16 %v1260, %v1259
        %v1307 = vpack.c.bf16 %v1262, %v1261
        %v1308 = vpack.c.bf16 %v1264, %v1263
        %v1309 = vpack.c.bf16 %v1266, %v1265
        %v1310 = vpack.c.bf16 %v1268, %v1267
        %v1311 = vpack.c.bf16 %v1270, %v1269
        %v1312 = vpack.c.bf16 %v1272, %v1271
        %v1313 = vpack.c.bf16 %v1274, %v1273
        %v1314 = vpack.c.bf16 %v1276, %v1275
        %v1315 = vpack.c.bf16 %v1278, %v1277
        %v1316 = vld [vmem:[%s2] sm:$0xf]
        %v1317 = vld [vmem:[%s2 + $0x4] sm:$0x3]
        %v1318 = vpack.c.bf16 %v1280, %v1279
        %v1319 = vpack.c.bf16 %v1281, %v1281
        %s1320 = scalar_lea.vmem %s2, 8
        %v1321 = vld [vmem:[%s1320] sm:$0xf]
        %v1322 = vld [vmem:[%s1320 + $0x4] sm:$0x3]
        %vm1356 = vcmask 1046528
        %v1357 = vrot.slane %v1285, 1
        %v1358 = vrot.slane %v1286, 1
        %v1359 = vsel %vm1356, %v1357, %v1358
        %v1360 = vrot.slane %v1287, 1
        %v1361 = vsel %vm1356, %v1358, %v1360
        %v1362 = vrot.slane %v1288, 1
        %v1363 = vsel %vm1356, %v1360, %v1362
        %v1364 = vrot.slane %v1289, 1
        %v1365 = vsel %vm1356, %v1362, %v1364
        %v1366 = vrot.slane %v1290, 1
        %v1367 = vsel %vm1356, %v1364, %v1366
        %v1368 = vrot.slane %v1291, 1
        %v1369 = vsel %vm1356, %v1366, %v1368
        %v1370 = vrot.slane %v1292, 1
        %v1371 = vsel %vm1356, %v1368, %v1370
        %v1372 = vrot.slane %v1293, 1
        %v1373 = vsel %vm1356, %v1370, %v1372
        %v1374 = vrot.slane %v1294, 1
        %v1375 = vsel %vm1356, %v1372, %v1374
        %v1376 = vrot.slane %v1295, 1
        %v1377 = vsel %vm1356, %v1374, %v1376
        %v1378 = vrot.slane %v1296, 1
        %v1379 = vsel %vm1356, %v1376, %v1378
        %v1380 = vrot.slane %v1297, 1
        %v1381 = vsel %vm1356, %v1378, %v1380
        %v1382 = vrot.slane %v1298, 1
        %v1383 = vsel %vm1356, %v1380, %v1382
        %v1384 = vrot.slane %v1299, 1
        %v1385 = vsel %vm1356, %v1382, %v1384
        %v1386 = vrot.slane %v1300, 1
        %v1387 = vsel %vm1356, %v1384, %v1386
        %v1388 = vrot.slane %v1301, 1
        %v1389 = vsel %vm1356, %v1386, %v1388
        %v1390 = vrot.slane %v1302, 1
        %v1391 = vsel %vm1356, %v1388, %v1390
        %v1392 = vrot.slane %v1303, 1
        %v1393 = vsel %vm1356, %v1390, %v1392
        %v1394 = vrot.slane %v1304, 1
        %v1395 = vsel %vm1356, %v1392, %v1394
        %v1396 = vrot.slane %v1305, 1
        %v1397 = vsel %vm1356, %v1394, %v1396
        %v1398 = vrot.slane %v1306, 1
        %v1399 = vsel %vm1356, %v1396, %v1398
        %v1400 = vrot.slane %v1307, 1
        %v1401 = vsel %vm1356, %v1398, %v1400
        %v1402 = vrot.slane %v1308, 1
        %v1403 = vsel %vm1356, %v1400, %v1402
        %v1404 = vrot.slane %v1309, 1
        %v1405 = vsel %vm1356, %v1402, %v1404
        %v1406 = vrot.slane %v1310, 1
        %v1407 = vsel %vm1356, %v1404, %v1406
        %v1408 = vrot.slane %v1311, 1
        %v1409 = vsel %vm1356, %v1406, %v1408
        %v1410 = vrot.slane %v1312, 1
        %v1411 = vsel %vm1356, %v1408, %v1410
        %v1412 = vrot.slane %v1313, 1
        %v1413 = vsel %vm1356, %v1410, %v1412
        %v1414 = vrot.slane %v1314, 1
        %v1415 = vsel %vm1356, %v1412, %v1414
        %v1416 = vrot.slane %v1315, 1
        %v1417 = vsel %vm1356, %v1414, %v1416
        %v1418 = vrot.slane %v1318, 1
        %v1419 = vsel %vm1356, %v1416, %v1418
        %v1420 = vrot.slane %v1319, 1
        %v1421 = vsel %vm1356, %v1418, %v1420
        %v1424 = vunpack.c.l.b16 %v1321
        %v1425 = vunpack.c.l.b16 %v1322
        %v1426 = vpack.c.b16 %v1425, %v1424
        %vm1427 = vcmask 97280
        %v1429 = vsel %vm1427, %v1359, 0
        %v1432 = vsel %vm1427, %v1361, 0
        %v1435 = vsel %vm1427, %v1363, 0
        %v1438 = vsel %vm1427, %v1365, 0
        %v1441 = vsel %vm1427, %v1367, 0
        %v1444 = vsel %vm1427, %v1369, 0
        %v1447 = vsel %vm1427, %v1371, 0
        %v1450 = vsel %vm1427, %v1373, 0
        %v1453 = vsel %vm1427, %v1375, 0
        %v1456 = vsel %vm1427, %v1377, 0
        %v1459 = vsel %vm1427, %v1379, 0
        %v1462 = vsel %vm1427, %v1381, 0
        %v1465 = vsel %vm1427, %v1383, 0
        %v1468 = vsel %vm1427, %v1385, 0
        %v1471 = vsel %vm1427, %v1387, 0
        %v1474 = vsel %vm1427, %v1389, 0
        %v1477 = vsel %vm1427, %v1391, 0
        %v1480 = vsel %vm1427, %v1393, 0
        %v1483 = vsel %vm1427, %v1395, 0
        %v1486 = vsel %vm1427, %v1397, 0
        %v1489 = vsel %vm1427, %v1399, 0
        %v1492 = vsel %vm1427, %v1401, 0
        %v1495 = vsel %vm1427, %v1403, 0
        %v1498 = vsel %vm1427, %v1405, 0
        %v1501 = vsel %vm1427, %v1407, 0
        %v1504 = vsel %vm1427, %v1409, 0
        %v1507 = vsel %vm1427, %v1411, 0
        %v1510 = vsel %vm1427, %v1413, 0
        %v1513 = vsel %vm1427, %v1415, 0
        %v1516 = vsel %vm1427, %v1417, 0
        %v1519 = vsel %vm1427, %v1419, 0
        %v1522 = vsel %vm1427, %v1421, 0
        %v1525 = vsel %vm799, %v1426, 0
        %1527 = vmatpush.bf16.msra.mxu0 0
        %1528 = vmatpush.bf16.msra.mxu0 0
        %1529 = vmatpush.bf16.msra.mxu0 0
        %1530 = vmatpush.bf16.msra.mxu0 0
        %1531 = vmatpush.bf16.msra.mxu0 0
        %1532 = vmatpush.bf16.msra.mxu0 0
        %1533 = vmatpush.bf16.msra.mxu0 0
        %1534 = vmatpush.bf16.msra.mxu0 %v1525
        %1535 = vmatmul.bf16.gmra.mxu0 %v1429
        %v1536 = vpop.f32.mrf.mxu0
        %v1537 = vadd.f32 0.0, %v1536
        %v1538 = vpop.f32.mrf.mxu0
        %v1539 = vadd.f32 0.0, %v1538
        %1540 = vmatmul.bf16.gmra.mxu0 %v1432
        %v1541 = vpop.f32.mrf.mxu0
        %v1542 = vadd.f32 0.0, %v1541
        %v1543 = vpop.f32.mrf.mxu0
        %v1544 = vadd.f32 0.0, %v1543
        %1545 = vmatmul.bf16.gmra.mxu0 %v1435
        %v1546 = vpop.f32.mrf.mxu0
        %v1547 = vadd.f32 0.0, %v1546
        %v1548 = vpop.f32.mrf.mxu0
        %v1549 = vadd.f32 0.0, %v1548
        %1550 = vmatmul.bf16.gmra.mxu0 %v1438
        %v1551 = vpop.f32.mrf.mxu0
        %v1552 = vadd.f32 0.0, %v1551
        %v1553 = vpop.f32.mrf.mxu0
        %v1554 = vadd.f32 0.0, %v1553
        %1555 = vmatmul.bf16.gmra.mxu0 %v1441
        %v1556 = vpop.f32.mrf.mxu0
        %v1557 = vadd.f32 0.0, %v1556
        %v1558 = vpop.f32.mrf.mxu0
        %v1559 = vadd.f32 0.0, %v1558
        %1560 = vmatmul.bf16.gmra.mxu0 %v1444
        %v1561 = vpop.f32.mrf.mxu0
        %v1562 = vadd.f32 0.0, %v1561
        %v1563 = vpop.f32.mrf.mxu0
        %v1564 = vadd.f32 0.0, %v1563
        %1565 = vmatmul.bf16.gmra.mxu0 %v1447
        %v1566 = vpop.f32.mrf.mxu0
        %v1567 = vadd.f32 0.0, %v1566
        %v1568 = vpop.f32.mrf.mxu0
        %v1569 = vadd.f32 0.0, %v1568
        %1570 = vmatmul.bf16.gmra.mxu0 %v1450
        %v1571 = vpop.f32.mrf.mxu0
        %v1572 = vadd.f32 0.0, %v1571
        %v1573 = vpop.f32.mrf.mxu0
        %v1574 = vadd.f32 0.0, %v1573
        %1575 = vmatmul.bf16.gmra.mxu0 %v1453
        %v1576 = vpop.f32.mrf.mxu0
        %v1577 = vadd.f32 0.0, %v1576
        %v1578 = vpop.f32.mrf.mxu0
        %v1579 = vadd.f32 0.0, %v1578
        %1580 = vmatmul.bf16.gmra.mxu0 %v1456
        %v1581 = vpop.f32.mrf.mxu0
        %v1582 = vadd.f32 0.0, %v1581
        %v1583 = vpop.f32.mrf.mxu0
        %v1584 = vadd.f32 0.0, %v1583
        %1585 = vmatmul.bf16.gmra.mxu0 %v1459
        %v1586 = vpop.f32.mrf.mxu0
        %v1587 = vadd.f32 0.0, %v1586
        %v1588 = vpop.f32.mrf.mxu0
        %v1589 = vadd.f32 0.0, %v1588
        %1590 = vmatmul.bf16.gmra.mxu0 %v1462
        %v1591 = vpop.f32.mrf.mxu0
        %v1592 = vadd.f32 0.0, %v1591
        %v1593 = vpop.f32.mrf.mxu0
        %v1594 = vadd.f32 0.0, %v1593
        %1595 = vmatmul.bf16.gmra.mxu0 %v1465
        %v1596 = vpop.f32.mrf.mxu0
        %v1597 = vadd.f32 0.0, %v1596
        %v1598 = vpop.f32.mrf.mxu0
        %v1599 = vadd.f32 0.0, %v1598
        %1600 = vmatmul.bf16.gmra.mxu0 %v1468
        %v1601 = vpop.f32.mrf.mxu0
        %v1602 = vadd.f32 0.0, %v1601
        %v1603 = vpop.f32.mrf.mxu0
        %v1604 = vadd.f32 0.0, %v1603
        %1605 = vmatmul.bf16.gmra.mxu0 %v1471
        %v1606 = vpop.f32.mrf.mxu0
        %v1607 = vadd.f32 0.0, %v1606
        %v1608 = vpop.f32.mrf.mxu0
        %v1609 = vadd.f32 0.0, %v1608
        %1610 = vmatmul.bf16.gmra.mxu0 %v1474
        %v1611 = vpop.f32.mrf.mxu0
        %v1612 = vadd.f32 0.0, %v1611
        %v1613 = vpop.f32.mrf.mxu0
        %v1614 = vadd.f32 0.0, %v1613
        %1615 = vmatmul.bf16.gmra.mxu0 %v1477
        %v1616 = vpop.f32.mrf.mxu0
        %v1617 = vadd.f32 0.0, %v1616
        %v1618 = vpop.f32.mrf.mxu0
        %v1619 = vadd.f32 0.0, %v1618
        %1620 = vmatmul.bf16.gmra.mxu0 %v1480
        %v1621 = vpop.f32.mrf.mxu0
        %v1622 = vadd.f32 0.0, %v1621
        %v1623 = vpop.f32.mrf.mxu0
        %v1624 = vadd.f32 0.0, %v1623
        %1625 = vmatmul.bf16.gmra.mxu0 %v1483
        %v1626 = vpop.f32.mrf.mxu0
        %v1627 = vadd.f32 0.0, %v1626
        %v1628 = vpop.f32.mrf.mxu0
        %v1629 = vadd.f32 0.0, %v1628
        %1630 = vmatmul.bf16.gmra.mxu0 %v1486
        %v1631 = vpop.f32.mrf.mxu0
        %v1632 = vadd.f32 0.0, %v1631
        %v1633 = vpop.f32.mrf.mxu0
        %v1634 = vadd.f32 0.0, %v1633
        %1635 = vmatmul.bf16.gmra.mxu0 %v1489
        %v1636 = vpop.f32.mrf.mxu0
        %v1637 = vadd.f32 0.0, %v1636
        %v1638 = vpop.f32.mrf.mxu0
        %v1639 = vadd.f32 0.0, %v1638
        %1640 = vmatmul.bf16.gmra.mxu0 %v1492
        %v1641 = vpop.f32.mrf.mxu0
        %v1642 = vadd.f32 0.0, %v1641
        %v1643 = vpop.f32.mrf.mxu0
        %v1644 = vadd.f32 0.0, %v1643
        %1645 = vmatmul.bf16.gmra.mxu0 %v1495
        %v1646 = vpop.f32.mrf.mxu0
        %v1647 = vadd.f32 0.0, %v1646
        %v1648 = vpop.f32.mrf.mxu0
        %v1649 = vadd.f32 0.0, %v1648
        %1650 = vmatmul.bf16.gmra.mxu0 %v1498
        %v1651 = vpop.f32.mrf.mxu0
        %v1652 = vadd.f32 0.0, %v1651
        %v1653 = vpop.f32.mrf.mxu0
        %v1654 = vadd.f32 0.0, %v1653
        %1655 = vmatmul.bf16.gmra.mxu0 %v1501
        %v1656 = vpop.f32.mrf.mxu0
        %v1657 = vadd.f32 0.0, %v1656
        %v1658 = vpop.f32.mrf.mxu0
        %v1659 = vadd.f32 0.0, %v1658
        %1660 = vmatmul.bf16.gmra.mxu0 %v1504
        %v1661 = vpop.f32.mrf.mxu0
        %v1662 = vadd.f32 0.0, %v1661
        %v1663 = vpop.f32.mrf.mxu0
        %v1664 = vadd.f32 0.0, %v1663
        %1665 = vmatmul.bf16.gmra.mxu0 %v1507
        %v1666 = vpop.f32.mrf.mxu0
        %v1667 = vadd.f32 0.0, %v1666
        %v1668 = vpop.f32.mrf.mxu0
        %v1669 = vadd.f32 0.0, %v1668
        %1670 = vmatmul.bf16.gmra.mxu0 %v1510
        %v1671 = vpop.f32.mrf.mxu0
        %v1672 = vadd.f32 0.0, %v1671
        %v1673 = vpop.f32.mrf.mxu0
        %v1674 = vadd.f32 0.0, %v1673
        %1675 = vmatmul.bf16.gmra.mxu0 %v1513
        %v1676 = vpop.f32.mrf.mxu0
        %v1677 = vadd.f32 0.0, %v1676
        %v1678 = vpop.f32.mrf.mxu0
        %v1679 = vadd.f32 0.0, %v1678
        %1680 = vmatmul.bf16.gmra.mxu0 %v1516
        %v1681 = vpop.f32.mrf.mxu0
        %v1682 = vadd.f32 0.0, %v1681
        %v1683 = vpop.f32.mrf.mxu0
        %v1684 = vadd.f32 0.0, %v1683
        %1685 = vmatmul.bf16.gmra.mxu0 %v1519
        %v1686 = vpop.f32.mrf.mxu0
        %v1687 = vadd.f32 0.0, %v1686
        %v1688 = vpop.f32.mrf.mxu0
        %v1689 = vadd.f32 0.0, %v1688
        %1690 = vmatmul.bf16.gmra.mxu0 %v1522
        %v1691 = vpop.f32.mrf.mxu0
        %v1692 = vadd.f32 0.0, %v1691
        %v1693 = vpop.f32.mrf.mxu0
        %v1694 = vadd.f32 0.0, %v1693
        %1695 = vdwg.mxu0
        %v1698 = vunpack.c.l.b16 %v1316
        %v1699 = vunpack.c.l.b16 %v1317
        %v1700 = vpack.c.b16 %v1699, %v1698
        %v1702 = vsel %vm1427, %v1284, 0
        %v1705 = vsel %vm1427, %v1285, 0
        %v1708 = vsel %vm1427, %v1286, 0
        %v1711 = vsel %vm1427, %v1287, 0
        %v1714 = vsel %vm1427, %v1288, 0
        %v1717 = vsel %vm1427, %v1289, 0
        %v1720 = vsel %vm1427, %v1290, 0
        %v1723 = vsel %vm1427, %v1291, 0
        %v1726 = vsel %vm1427, %v1292, 0
        %v1729 = vsel %vm1427, %v1293, 0
        %v1732 = vsel %vm1427, %v1294, 0
        %v1735 = vsel %vm1427, %v1295, 0
        %v1738 = vsel %vm1427, %v1296, 0
        %v1741 = vsel %vm1427, %v1297, 0
        %v1744 = vsel %vm1427, %v1298, 0
        %v1747 = vsel %vm1427, %v1299, 0
        %v1750 = vsel %vm1427, %v1300, 0
        %v1753 = vsel %vm1427, %v1301, 0
        %v1756 = vsel %vm1427, %v1302, 0
        %v1759 = vsel %vm1427, %v1303, 0
        %v1762 = vsel %vm1427, %v1304, 0
        %v1765 = vsel %vm1427, %v1305, 0
        %v1768 = vsel %vm1427, %v1306, 0
        %v1771 = vsel %vm1427, %v1307, 0
        %v1774 = vsel %vm1427, %v1308, 0
        %v1777 = vsel %vm1427, %v1309, 0
        %v1780 = vsel %vm1427, %v1310, 0
        %v1783 = vsel %vm1427, %v1311, 0
        %v1786 = vsel %vm1427, %v1312, 0
        %v1789 = vsel %vm1427, %v1313, 0
        %v1792 = vsel %vm1427, %v1314, 0
        %v1795 = vsel %vm1427, %v1315, 0
        %v1798 = vsel %vm799, %v1700, 0
        %1800 = vmatpush.bf16.msra.mxu0 0
        %1801 = vmatpush.bf16.msra.mxu0 0
        %1802 = vmatpush.bf16.msra.mxu0 0
        %1803 = vmatpush.bf16.msra.mxu0 0
        %1804 = vmatpush.bf16.msra.mxu0 0
        %1805 = vmatpush.bf16.msra.mxu0 0
        %1806 = vmatpush.bf16.msra.mxu0 0
        %1807 = vmatpush.bf16.msra.mxu0 %v1798
        %1808 = vmatmul.bf16.gmra.mxu0 %v1702
        %v1809 = vpop.f32.mrf.mxu0
        %v1810 = vadd.f32 %v1537, %v1809
        %v1811 = vpop.f32.mrf.mxu0
        %v1812 = vadd.f32 %v1539, %v1811
        %1813 = vmatmul.bf16.gmra.mxu0 %v1705
        %v1814 = vpop.f32.mrf.mxu0
        %v1815 = vadd.f32 %v1542, %v1814
        %v1816 = vpop.f32.mrf.mxu0
        %v1817 = vadd.f32 %v1544, %v1816
        %1818 = vmatmul.bf16.gmra.mxu0 %v1708
        %v1819 = vpop.f32.mrf.mxu0
        %v1820 = vadd.f32 %v1547, %v1819
        %v1821 = vpop.f32.mrf.mxu0
        %v1822 = vadd.f32 %v1549, %v1821
        %1823 = vmatmul.bf16.gmra.mxu0 %v1711
        %v1824 = vpop.f32.mrf.mxu0
        %v1825 = vadd.f32 %v1552, %v1824
        %v1826 = vpop.f32.mrf.mxu0
        %v1827 = vadd.f32 %v1554, %v1826
        %1828 = vmatmul.bf16.gmra.mxu0 %v1714
        %v1829 = vpop.f32.mrf.mxu0
        %v1830 = vadd.f32 %v1557, %v1829
        %v1831 = vpop.f32.mrf.mxu0
        %v1832 = vadd.f32 %v1559, %v1831
        %1833 = vmatmul.bf16.gmra.mxu0 %v1717
        %v1834 = vpop.f32.mrf.mxu0
        %v1835 = vadd.f32 %v1562, %v1834
        %v1836 = vpop.f32.mrf.mxu0
        %v1837 = vadd.f32 %v1564, %v1836
        %1838 = vmatmul.bf16.gmra.mxu0 %v1720
        %v1839 = vpop.f32.mrf.mxu0
        %v1840 = vadd.f32 %v1567, %v1839
        %v1841 = vpop.f32.mrf.mxu0
        %v1842 = vadd.f32 %v1569, %v1841
        %1843 = vmatmul.bf16.gmra.mxu0 %v1723
        %v1844 = vpop.f32.mrf.mxu0
        %v1845 = vadd.f32 %v1572, %v1844
        %v1846 = vpop.f32.mrf.mxu0
        %v1847 = vadd.f32 %v1574, %v1846
        %1848 = vmatmul.bf16.gmra.mxu0 %v1726
        %v1849 = vpop.f32.mrf.mxu0
        %v1850 = vadd.f32 %v1577, %v1849
        %v1851 = vpop.f32.mrf.mxu0
        %v1852 = vadd.f32 %v1579, %v1851
        %1853 = vmatmul.bf16.gmra.mxu0 %v1729
        %v1854 = vpop.f32.mrf.mxu0
        %v1855 = vadd.f32 %v1582, %v1854
        %v1856 = vpop.f32.mrf.mxu0
        %v1857 = vadd.f32 %v1584, %v1856
        %1858 = vmatmul.bf16.gmra.mxu0 %v1732
        %v1859 = vpop.f32.mrf.mxu0
        %v1860 = vadd.f32 %v1587, %v1859
        %v1861 = vpop.f32.mrf.mxu0
        %v1862 = vadd.f32 %v1589, %v1861
        %1863 = vmatmul.bf16.gmra.mxu0 %v1735
        %v1864 = vpop.f32.mrf.mxu0
        %v1865 = vadd.f32 %v1592, %v1864
        %v1866 = vpop.f32.mrf.mxu0
        %v1867 = vadd.f32 %v1594, %v1866
        %1868 = vmatmul.bf16.gmra.mxu0 %v1738
        %v1869 = vpop.f32.mrf.mxu0
        %v1870 = vadd.f32 %v1597, %v1869
        %v1871 = vpop.f32.mrf.mxu0
        %v1872 = vadd.f32 %v1599, %v1871
        %1873 = vmatmul.bf16.gmra.mxu0 %v1741
        %v1874 = vpop.f32.mrf.mxu0
        %v1875 = vadd.f32 %v1602, %v1874
        %v1876 = vpop.f32.mrf.mxu0
        %v1877 = vadd.f32 %v1604, %v1876
        %1878 = vmatmul.bf16.gmra.mxu0 %v1744
        %v1879 = vpop.f32.mrf.mxu0
        %v1880 = vadd.f32 %v1607, %v1879
        %v1881 = vpop.f32.mrf.mxu0
        %v1882 = vadd.f32 %v1609, %v1881
        %1883 = vmatmul.bf16.gmra.mxu0 %v1747
        %v1884 = vpop.f32.mrf.mxu0
        %v1885 = vadd.f32 %v1612, %v1884
        %v1886 = vpop.f32.mrf.mxu0
        %v1887 = vadd.f32 %v1614, %v1886
        %1888 = vmatmul.bf16.gmra.mxu0 %v1750
        %v1889 = vpop.f32.mrf.mxu0
        %v1890 = vadd.f32 %v1617, %v1889
        %v1891 = vpop.f32.mrf.mxu0
        %v1892 = vadd.f32 %v1619, %v1891
        %1893 = vmatmul.bf16.gmra.mxu0 %v1753
        %v1894 = vpop.f32.mrf.mxu0
        %v1895 = vadd.f32 %v1622, %v1894
        %v1896 = vpop.f32.mrf.mxu0
        %v1897 = vadd.f32 %v1624, %v1896
        %1898 = vmatmul.bf16.gmra.mxu0 %v1756
        %v1899 = vpop.f32.mrf.mxu0
        %v1900 = vadd.f32 %v1627, %v1899
        %v1901 = vpop.f32.mrf.mxu0
        %v1902 = vadd.f32 %v1629, %v1901
        %1903 = vmatmul.bf16.gmra.mxu0 %v1759
        %v1904 = vpop.f32.mrf.mxu0
        %v1905 = vadd.f32 %v1632, %v1904
        %v1906 = vpop.f32.mrf.mxu0
        %v1907 = vadd.f32 %v1634, %v1906
        %1908 = vmatmul.bf16.gmra.mxu0 %v1762
        %v1909 = vpop.f32.mrf.mxu0
        %v1910 = vadd.f32 %v1637, %v1909
        %v1911 = vpop.f32.mrf.mxu0
        %v1912 = vadd.f32 %v1639, %v1911
        %1913 = vmatmul.bf16.gmra.mxu0 %v1765
        %v1914 = vpop.f32.mrf.mxu0
        %v1915 = vadd.f32 %v1642, %v1914
        %v1916 = vpop.f32.mrf.mxu0
        %v1917 = vadd.f32 %v1644, %v1916
        %1918 = vmatmul.bf16.gmra.mxu0 %v1768
        %v1919 = vpop.f32.mrf.mxu0
        %v1920 = vadd.f32 %v1647, %v1919
        %v1921 = vpop.f32.mrf.mxu0
        %v1922 = vadd.f32 %v1649, %v1921
        %1923 = vmatmul.bf16.gmra.mxu0 %v1771
        %v1924 = vpop.f32.mrf.mxu0
        %v1925 = vadd.f32 %v1652, %v1924
        %v1926 = vpop.f32.mrf.mxu0
        %v1927 = vadd.f32 %v1654, %v1926
        %1928 = vmatmul.bf16.gmra.mxu0 %v1774
        %v1929 = vpop.f32.mrf.mxu0
        %v1930 = vadd.f32 %v1657, %v1929
        %v1931 = vpop.f32.mrf.mxu0
        %v1932 = vadd.f32 %v1659, %v1931
        %1933 = vmatmul.bf16.gmra.mxu0 %v1777
        %v1934 = vpop.f32.mrf.mxu0
        %v1935 = vadd.f32 %v1662, %v1934
        %v1936 = vpop.f32.mrf.mxu0
        %v1937 = vadd.f32 %v1664, %v1936
        %1938 = vmatmul.bf16.gmra.mxu0 %v1780
        %v1939 = vpop.f32.mrf.mxu0
        %v1940 = vadd.f32 %v1667, %v1939
        %v1941 = vpop.f32.mrf.mxu0
        %v1942 = vadd.f32 %v1669, %v1941
        %1943 = vmatmul.bf16.gmra.mxu0 %v1783
        %v1944 = vpop.f32.mrf.mxu0
        %v1945 = vadd.f32 %v1672, %v1944
        %v1946 = vpop.f32.mrf.mxu0
        %v1947 = vadd.f32 %v1674, %v1946
        %1948 = vmatmul.bf16.gmra.mxu0 %v1786
        %v1949 = vpop.f32.mrf.mxu0
        %v1950 = vadd.f32 %v1677, %v1949
        %v1951 = vpop.f32.mrf.mxu0
        %v1952 = vadd.f32 %v1679, %v1951
        %1953 = vmatmul.bf16.gmra.mxu0 %v1789
        %v1954 = vpop.f32.mrf.mxu0
        %v1955 = vadd.f32 %v1682, %v1954
        %v1956 = vpop.f32.mrf.mxu0
        %v1957 = vadd.f32 %v1684, %v1956
        %1958 = vmatmul.bf16.gmra.mxu0 %v1792
        %v1959 = vpop.f32.mrf.mxu0
        %v1960 = vadd.f32 %v1687, %v1959
        %v1961 = vpop.f32.mrf.mxu0
        %v1962 = vadd.f32 %v1689, %v1961
        %1963 = vmatmul.bf16.gmra.mxu0 %v1795
        %v1964 = vpop.f32.mrf.mxu0
        %v1965 = vadd.f32 %v1692, %v1964
        %v1966 = vpop.f32.mrf.mxu0
        %v1967 = vadd.f32 %v1694, %v1966
        %1968 = vdwg.mxu0
        %v1969 = vpack.c.bf16 %v1282, %v1281
        %v1970 = vpack.c.bf16 %v1283, %v1283
        %s1971 = scalar_lea.vmem %s2, 16
        %v1972 = vld [vmem:[%s1971] sm:$0xf]
        %v1973 = vld [vmem:[%s1971 + $0x4] sm:$0x3]
        %vm1976 = vcmask 1045504
        %v1977 = vrot.slane %v1286, 2
        %v1978 = vrot.slane %v1287, 2
        %v1979 = vsel %vm1976, %v1977, %v1978
        %v1980 = vrot.slane %v1288, 2
        %v1981 = vsel %vm1976, %v1978, %v1980
        %v1982 = vrot.slane %v1289, 2
        %v1983 = vsel %vm1976, %v1980, %v1982
        %v1984 = vrot.slane %v1290, 2
        %v1985 = vsel %vm1976, %v1982, %v1984
        %v1986 = vrot.slane %v1291, 2
        %v1987 = vsel %vm1976, %v1984, %v1986
        %v1988 = vrot.slane %v1292, 2
        %v1989 = vsel %vm1976, %v1986, %v1988
        %v1990 = vrot.slane %v1293, 2
        %v1991 = vsel %vm1976, %v1988, %v1990
        %v1992 = vrot.slane %v1294, 2
        %v1993 = vsel %vm1976, %v1990, %v1992
        %v1994 = vrot.slane %v1295, 2
        %v1995 = vsel %vm1976, %v1992, %v1994
        %v1996 = vrot.slane %v1296, 2
        %v1997 = vsel %vm1976, %v1994, %v1996
        %v1998 = vrot.slane %v1297, 2
        %v1999 = vsel %vm1976, %v1996, %v1998
        %v2000 = vrot.slane %v1298, 2
        %v2001 = vsel %vm1976, %v1998, %v2000
        %v2002 = vrot.slane %v1299, 2
        %v2003 = vsel %vm1976, %v2000, %v2002
        %v2004 = vrot.slane %v1300, 2
        %v2005 = vsel %vm1976, %v2002, %v2004
        %v2006 = vrot.slane %v1301, 2
        %v2007 = vsel %vm1976, %v2004, %v2006
        %v2008 = vrot.slane %v1302, 2
        %v2009 = vsel %vm1976, %v2006, %v2008
        %v2010 = vrot.slane %v1303, 2
        %v2011 = vsel %vm1976, %v2008, %v2010
        %v2012 = vrot.slane %v1304, 2
        %v2013 = vsel %vm1976, %v2010, %v2012
        %v2014 = vrot.slane %v1305, 2
        %v2015 = vsel %vm1976, %v2012, %v2014
        %v2016 = vrot.slane %v1306, 2
        %v2017 = vsel %vm1976, %v2014, %v2016
        %v2018 = vrot.slane %v1307, 2
        %v2019 = vsel %vm1976, %v2016, %v2018
        %v2020 = vrot.slane %v1308, 2
        %v2021 = vsel %vm1976, %v2018, %v2020
        %v2022 = vrot.slane %v1309, 2
        %v2023 = vsel %vm1976, %v2020, %v2022
        %v2024 = vrot.slane %v1310, 2
        %v2025 = vsel %vm1976, %v2022, %v2024
        %v2026 = vrot.slane %v1311, 2
        %v2027 = vsel %vm1976, %v2024, %v2026
        %v2028 = vrot.slane %v1312, 2
        %v2029 = vsel %vm1976, %v2026, %v2028
        %v2030 = vrot.slane %v1313, 2
        %v2031 = vsel %vm1976, %v2028, %v2030
        %v2032 = vrot.slane %v1314, 2
        %v2033 = vsel %vm1976, %v2030, %v2032
        %v2034 = vrot.slane %v1315, 2
        %v2035 = vsel %vm1976, %v2032, %v2034
        %v2036 = vrot.slane %v1318, 2
        %v2037 = vsel %vm1976, %v2034, %v2036
        %v2038 = vrot.slane %v1969, 2
        %v2039 = vsel %vm1976, %v2036, %v2038
        %v2040 = vrot.slane %v1970, 2
        %v2041 = vsel %vm1976, %v2038, %v2040
        %v2044 = vunpack.c.l.b16 %v1972
        %v2045 = vunpack.c.l.b16 %v1973
        %v2046 = vpack.c.b16 %v2045, %v2044
        %v2048 = vsel %vm1427, %v1979, 0
        %v2051 = vsel %vm1427, %v1981, 0
        %v2054 = vsel %vm1427, %v1983, 0
        %v2057 = vsel %vm1427, %v1985, 0
        %v2060 = vsel %vm1427, %v1987, 0
        %v2063 = vsel %vm1427, %v1989, 0
        %v2066 = vsel %vm1427, %v1991, 0
        %v2069 = vsel %vm1427, %v1993, 0
        %v2072 = vsel %vm1427, %v1995, 0
        %v2075 = vsel %vm1427, %v1997, 0
        %v2078 = vsel %vm1427, %v1999, 0
        %v2081 = vsel %vm1427, %v2001, 0
        %v2084 = vsel %vm1427, %v2003, 0
        %v2087 = vsel %vm1427, %v2005, 0
        %v2090 = vsel %vm1427, %v2007, 0
        %v2093 = vsel %vm1427, %v2009, 0
        %v2096 = vsel %vm1427, %v2011, 0
        %v2099 = vsel %vm1427, %v2013, 0
        %v2102 = vsel %vm1427, %v2015, 0
        %v2105 = vsel %vm1427, %v2017, 0
        %v2108 = vsel %vm1427, %v2019, 0
        %v2111 = vsel %vm1427, %v2021, 0
        %v2114 = vsel %vm1427, %v2023, 0
        %v2117 = vsel %vm1427, %v2025, 0
        %v2120 = vsel %vm1427, %v2027, 0
        %v2123 = vsel %vm1427, %v2029, 0
        %v2126 = vsel %vm1427, %v2031, 0
        %v2129 = vsel %vm1427, %v2033, 0
        %v2132 = vsel %vm1427, %v2035, 0
        %v2135 = vsel %vm1427, %v2037, 0
        %v2138 = vsel %vm1427, %v2039, 0
        %v2141 = vsel %vm1427, %v2041, 0
        %v2144 = vsel %vm799, %v2046, 0
        %2146 = vmatpush.bf16.msra.mxu0 0
        %2147 = vmatpush.bf16.msra.mxu0 0
        %2148 = vmatpush.bf16.msra.mxu0 0
        %2149 = vmatpush.bf16.msra.mxu0 0
        %2150 = vmatpush.bf16.msra.mxu0 0
        %2151 = vmatpush.bf16.msra.mxu0 0
        %2152 = vmatpush.bf16.msra.mxu0 0
        %2153 = vmatpush.bf16.msra.mxu0 %v2144
        %2154 = vmatmul.bf16.gmra.mxu0 %v2048
        %v2155 = vpop.f32.mrf.mxu0
        %v2156 = vadd.f32 0.0, %v2155
        %v2157 = vpop.f32.mrf.mxu0
        %v2158 = vadd.f32 0.0, %v2157
        %2159 = vmatmul.bf16.gmra.mxu0 %v2051
        %v2160 = vpop.f32.mrf.mxu0
        %v2161 = vadd.f32 0.0, %v2160
        %v2162 = vpop.f32.mrf.mxu0
        %v2163 = vadd.f32 0.0, %v2162
        %2164 = vmatmul.bf16.gmra.mxu0 %v2054
        %v2165 = vpop.f32.mrf.mxu0
        %v2166 = vadd.f32 0.0, %v2165
        %v2167 = vpop.f32.mrf.mxu0
        %v2168 = vadd.f32 0.0, %v2167
        %2169 = vmatmul.bf16.gmra.mxu0 %v2057
        %v2170 = vpop.f32.mrf.mxu0
        %v2171 = vadd.f32 0.0, %v2170
        %v2172 = vpop.f32.mrf.mxu0
        %v2173 = vadd.f32 0.0, %v2172
        %2174 = vmatmul.bf16.gmra.mxu0 %v2060
        %v2175 = vpop.f32.mrf.mxu0
        %v2176 = vadd.f32 0.0, %v2175
        %v2177 = vpop.f32.mrf.mxu0
        %v2178 = vadd.f32 0.0, %v2177
        %2179 = vmatmul.bf16.gmra.mxu0 %v2063
        %v2180 = vpop.f32.mrf.mxu0
        %v2181 = vadd.f32 0.0, %v2180
        %v2182 = vpop.f32.mrf.mxu0
        %v2183 = vadd.f32 0.0, %v2182
        %2184 = vmatmul.bf16.gmra.mxu0 %v2066
        %v2185 = vpop.f32.mrf.mxu0
        %v2186 = vadd.f32 0.0, %v2185
        %v2187 = vpop.f32.mrf.mxu0
        %v2188 = vadd.f32 0.0, %v2187
        %2189 = vmatmul.bf16.gmra.mxu0 %v2069
        %v2190 = vpop.f32.mrf.mxu0
        %v2191 = vadd.f32 0.0, %v2190
        %v2192 = vpop.f32.mrf.mxu0
        %v2193 = vadd.f32 0.0, %v2192
        %2194 = vmatmul.bf16.gmra.mxu0 %v2072
        %v2195 = vpop.f32.mrf.mxu0
        %v2196 = vadd.f32 0.0, %v2195
        %v2197 = vpop.f32.mrf.mxu0
        %v2198 = vadd.f32 0.0, %v2197
        %2199 = vmatmul.bf16.gmra.mxu0 %v2075
        %v2200 = vpop.f32.mrf.mxu0
        %v2201 = vadd.f32 0.0, %v2200
        %v2202 = vpop.f32.mrf.mxu0
        %v2203 = vadd.f32 0.0, %v2202
        %2204 = vmatmul.bf16.gmra.mxu0 %v2078
        %v2205 = vpop.f32.mrf.mxu0
        %v2206 = vadd.f32 0.0, %v2205
        %v2207 = vpop.f32.mrf.mxu0
        %v2208 = vadd.f32 0.0, %v2207
        %2209 = vmatmul.bf16.gmra.mxu0 %v2081
        %v2210 = vpop.f32.mrf.mxu0
        %v2211 = vadd.f32 0.0, %v2210
        %v2212 = vpop.f32.mrf.mxu0
        %v2213 = vadd.f32 0.0, %v2212
        %2214 = vmatmul.bf16.gmra.mxu0 %v2084
        %v2215 = vpop.f32.mrf.mxu0
        %v2216 = vadd.f32 0.0, %v2215
        %v2217 = vpop.f32.mrf.mxu0
        %v2218 = vadd.f32 0.0, %v2217
        %2219 = vmatmul.bf16.gmra.mxu0 %v2087
        %v2220 = vpop.f32.mrf.mxu0
        %v2221 = vadd.f32 0.0, %v2220
        %v2222 = vpop.f32.mrf.mxu0
        %v2223 = vadd.f32 0.0, %v2222
        %2224 = vmatmul.bf16.gmra.mxu0 %v2090
        %v2225 = vpop.f32.mrf.mxu0
        %v2226 = vadd.f32 0.0, %v2225
        %v2227 = vpop.f32.mrf.mxu0
        %v2228 = vadd.f32 0.0, %v2227
        %2229 = vmatmul.bf16.gmra.mxu0 %v2093
        %v2230 = vpop.f32.mrf.mxu0
        %v2231 = vadd.f32 0.0, %v2230
        %v2232 = vpop.f32.mrf.mxu0
        %v2233 = vadd.f32 0.0, %v2232
        %2234 = vmatmul.bf16.gmra.mxu0 %v2096
        %v2235 = vpop.f32.mrf.mxu0
        %v2236 = vadd.f32 0.0, %v2235
        %v2237 = vpop.f32.mrf.mxu0
        %v2238 = vadd.f32 0.0, %v2237
        %2239 = vmatmul.bf16.gmra.mxu0 %v2099
        %v2240 = vpop.f32.mrf.mxu0
        %v2241 = vadd.f32 0.0, %v2240
        %v2242 = vpop.f32.mrf.mxu0
        %v2243 = vadd.f32 0.0, %v2242
        %2244 = vmatmul.bf16.gmra.mxu0 %v2102
        %v2245 = vpop.f32.mrf.mxu0
        %v2246 = vadd.f32 0.0, %v2245
        %v2247 = vpop.f32.mrf.mxu0
        %v2248 = vadd.f32 0.0, %v2247
        %2249 = vmatmul.bf16.gmra.mxu0 %v2105
        %v2250 = vpop.f32.mrf.mxu0
        %v2251 = vadd.f32 0.0, %v2250
        %v2252 = vpop.f32.mrf.mxu0
        %v2253 = vadd.f32 0.0, %v2252
        %2254 = vmatmul.bf16.gmra.mxu0 %v2108
        %v2255 = vpop.f32.mrf.mxu0
        %v2256 = vadd.f32 0.0, %v2255
        %v2257 = vpop.f32.mrf.mxu0
        %v2258 = vadd.f32 0.0, %v2257
        %2259 = vmatmul.bf16.gmra.mxu0 %v2111
        %v2260 = vpop.f32.mrf.mxu0
        %v2261 = vadd.f32 0.0, %v2260
        %v2262 = vpop.f32.mrf.mxu0
        %v2263 = vadd.f32 0.0, %v2262
        %2264 = vmatmul.bf16.gmra.mxu0 %v2114
        %v2265 = vpop.f32.mrf.mxu0
        %v2266 = vadd.f32 0.0, %v2265
        %v2267 = vpop.f32.mrf.mxu0
        %v2268 = vadd.f32 0.0, %v2267
        %2269 = vmatmul.bf16.gmra.mxu0 %v2117
        %v2270 = vpop.f32.mrf.mxu0
        %v2271 = vadd.f32 0.0, %v2270
        %v2272 = vpop.f32.mrf.mxu0
        %v2273 = vadd.f32 0.0, %v2272
        %2274 = vmatmul.bf16.gmra.mxu0 %v2120
        %v2275 = vpop.f32.mrf.mxu0
        %v2276 = vadd.f32 0.0, %v2275
        %v2277 = vpop.f32.mrf.mxu0
        %v2278 = vadd.f32 0.0, %v2277
        %2279 = vmatmul.bf16.gmra.mxu0 %v2123
        %v2280 = vpop.f32.mrf.mxu0
        %v2281 = vadd.f32 0.0, %v2280
        %v2282 = vpop.f32.mrf.mxu0
        %v2283 = vadd.f32 0.0, %v2282
        %2284 = vmatmul.bf16.gmra.mxu0 %v2126
        %v2285 = vpop.f32.mrf.mxu0
        %v2286 = vadd.f32 0.0, %v2285
        %v2287 = vpop.f32.mrf.mxu0
        %v2288 = vadd.f32 0.0, %v2287
        %2289 = vmatmul.bf16.gmra.mxu0 %v2129
        %v2290 = vpop.f32.mrf.mxu0
        %v2291 = vadd.f32 0.0, %v2290
        %v2292 = vpop.f32.mrf.mxu0
        %v2293 = vadd.f32 0.0, %v2292
        %2294 = vmatmul.bf16.gmra.mxu0 %v2132
        %v2295 = vpop.f32.mrf.mxu0
        %v2296 = vadd.f32 0.0, %v2295
        %v2297 = vpop.f32.mrf.mxu0
        %v2298 = vadd.f32 0.0, %v2297
        %2299 = vmatmul.bf16.gmra.mxu0 %v2135
        %v2300 = vpop.f32.mrf.mxu0
        %v2301 = vadd.f32 0.0, %v2300
        %v2302 = vpop.f32.mrf.mxu0
        %v2303 = vadd.f32 0.0, %v2302
        %2304 = vmatmul.bf16.gmra.mxu0 %v2138
        %v2305 = vpop.f32.mrf.mxu0
        %v2306 = vadd.f32 0.0, %v2305
        %v2307 = vpop.f32.mrf.mxu0
        %v2308 = vadd.f32 0.0, %v2307
        %2309 = vmatmul.bf16.gmra.mxu0 %v2141
        %v2310 = vpop.f32.mrf.mxu0
        %v2311 = vadd.f32 0.0, %v2310
        %v2312 = vpop.f32.mrf.mxu0
        %v2313 = vadd.f32 0.0, %v2312
        %2314 = vdwg.mxu0
        %v2315 = vadd.f32 %v1810, %v2156
        %v2316 = vadd.f32 %v1812, %v2158
        %v2317 = vadd.f32 %v1815, %v2161
        %v2318 = vadd.f32 %v1817, %v2163
        %v2319 = vadd.f32 %v1820, %v2166
        %v2320 = vadd.f32 %v1822, %v2168
        %v2321 = vadd.f32 %v1825, %v2171
        %v2322 = vadd.f32 %v1827, %v2173
        %v2323 = vadd.f32 %v1830, %v2176
        %v2324 = vadd.f32 %v1832, %v2178
        %v2325 = vadd.f32 %v1835, %v2181
        %v2326 = vadd.f32 %v1837, %v2183
        %v2327 = vadd.f32 %v1840, %v2186
        %v2328 = vadd.f32 %v1842, %v2188
        %v2329 = vadd.f32 %v1845, %v2191
        %v2330 = vadd.f32 %v1847, %v2193
        %v2331 = vadd.f32 %v1850, %v2196
        %v2332 = vadd.f32 %v1852, %v2198
        %v2333 = vadd.f32 %v1855, %v2201
        %v2334 = vadd.f32 %v1857, %v2203
        %v2335 = vadd.f32 %v1860, %v2206
        %v2336 = vadd.f32 %v1862, %v2208
        %v2337 = vadd.f32 %v1865, %v2211
        %v2338 = vadd.f32 %v1867, %v2213
        %v2339 = vadd.f32 %v1870, %v2216
        %v2340 = vadd.f32 %v1872, %v2218
        %v2341 = vadd.f32 %v1875, %v2221
        %v2342 = vadd.f32 %v1877, %v2223
        %v2343 = vadd.f32 %v1880, %v2226
        %v2344 = vadd.f32 %v1882, %v2228
        %v2345 = vadd.f32 %v1885, %v2231
        %v2346 = vadd.f32 %v1887, %v2233
        %v2347 = vadd.f32 %v1890, %v2236
        %v2348 = vadd.f32 %v1892, %v2238
        %v2349 = vadd.f32 %v1895, %v2241
        %v2350 = vadd.f32 %v1897, %v2243
        %v2351 = vadd.f32 %v1900, %v2246
        %v2352 = vadd.f32 %v1902, %v2248
        %v2353 = vadd.f32 %v1905, %v2251
        %v2354 = vadd.f32 %v1907, %v2253
        %v2355 = vadd.f32 %v1910, %v2256
        %v2356 = vadd.f32 %v1912, %v2258
        %v2357 = vadd.f32 %v1915, %v2261
        %v2358 = vadd.f32 %v1917, %v2263
        %v2359 = vadd.f32 %v1920, %v2266
        %v2360 = vadd.f32 %v1922, %v2268
        %v2361 = vadd.f32 %v1925, %v2271
        %v2362 = vadd.f32 %v1927, %v2273
        %v2363 = vadd.f32 %v1930, %v2276
        %v2364 = vadd.f32 %v1932, %v2278
        %v2365 = vadd.f32 %v1935, %v2281
        %v2366 = vadd.f32 %v1937, %v2283
        %v2367 = vadd.f32 %v1940, %v2286
        %v2368 = vadd.f32 %v1942, %v2288
        %v2369 = vadd.f32 %v1945, %v2291
        %v2370 = vadd.f32 %v1947, %v2293
        %v2371 = vadd.f32 %v1950, %v2296
        %v2372 = vadd.f32 %v1952, %v2298
        %v2373 = vadd.f32 %v1955, %v2301
        %v2374 = vadd.f32 %v1957, %v2303
        %v2375 = vadd.f32 %v1960, %v2306
        %v2376 = vadd.f32 %v1962, %v2308
        %v2377 = vadd.f32 %v1965, %v2311
        %v2378 = vadd.f32 %v1967, %v2313
        %v2379 = vld [vmem:[%s3] sm:$0x1]
        %v2381 = vperm.slane %v2379, 0
        %v2383 = vmul.f32 %v2315, %v2381
        %v2384 = vmul.f32 %v2316, %v2381
        %v2385 = vmul.f32 %v2317, %v2381
        %v2386 = vmul.f32 %v2318, %v2381
        %v2387 = vmul.f32 %v2319, %v2381
        %v2388 = vmul.f32 %v2320, %v2381
        %v2389 = vmul.f32 %v2321, %v2381
        %v2390 = vmul.f32 %v2322, %v2381
        %v2391 = vmul.f32 %v2323, %v2381
        %v2392 = vmul.f32 %v2324, %v2381
        %v2393 = vmul.f32 %v2325, %v2381
        %v2394 = vmul.f32 %v2326, %v2381
        %v2395 = vmul.f32 %v2327, %v2381
        %v2396 = vmul.f32 %v2328, %v2381
        %v2397 = vmul.f32 %v2329, %v2381
        %v2398 = vmul.f32 %v2330, %v2381
        %v2399 = vmul.f32 %v2331, %v2381
        %v2400 = vmul.f32 %v2332, %v2381
        %v2401 = vmul.f32 %v2333, %v2381
        %v2402 = vmul.f32 %v2334, %v2381
        %v2403 = vmul.f32 %v2335, %v2381
        %v2404 = vmul.f32 %v2336, %v2381
        %v2405 = vmul.f32 %v2337, %v2381
        %v2406 = vmul.f32 %v2338, %v2381
        %v2407 = vmul.f32 %v2339, %v2381
        %v2408 = vmul.f32 %v2340, %v2381
        %v2409 = vmul.f32 %v2341, %v2381
        %v2410 = vmul.f32 %v2342, %v2381
        %v2411 = vmul.f32 %v2343, %v2381
        %v2412 = vmul.f32 %v2344, %v2381
        %v2413 = vmul.f32 %v2345, %v2381
        %v2414 = vmul.f32 %v2346, %v2381
        %v2415 = vmul.f32 %v2347, %v2381
        %v2416 = vmul.f32 %v2348, %v2381
        %v2417 = vmul.f32 %v2349, %v2381
        %v2418 = vmul.f32 %v2350, %v2381
        %v2419 = vmul.f32 %v2351, %v2381
        %v2420 = vmul.f32 %v2352, %v2381
        %v2421 = vmul.f32 %v2353, %v2381
        %v2422 = vmul.f32 %v2354, %v2381
        %v2423 = vmul.f32 %v2355, %v2381
        %v2424 = vmul.f32 %v2356, %v2381
        %v2425 = vmul.f32 %v2357, %v2381
        %v2426 = vmul.f32 %v2358, %v2381
        %v2427 = vmul.f32 %v2359, %v2381
        %v2428 = vmul.f32 %v2360, %v2381
        %v2429 = vmul.f32 %v2361, %v2381
        %v2430 = vmul.f32 %v2362, %v2381
        %v2431 = vmul.f32 %v2363, %v2381
        %v2432 = vmul.f32 %v2364, %v2381
        %v2433 = vmul.f32 %v2365, %v2381
        %v2434 = vmul.f32 %v2366, %v2381
        %v2435 = vmul.f32 %v2367, %v2381
        %v2436 = vmul.f32 %v2368, %v2381
        %v2437 = vmul.f32 %v2369, %v2381
        %v2438 = vmul.f32 %v2370, %v2381
        %v2439 = vmul.f32 %v2371, %v2381
        %v2440 = vmul.f32 %v2372, %v2381
        %v2441 = vmul.f32 %v2373, %v2381
        %v2442 = vmul.f32 %v2374, %v2381
        %v2443 = vmul.f32 %v2375, %v2381
        %v2444 = vmul.f32 %v2376, %v2381
        %v2445 = vmul.f32 %v2377, %v2381
        %v2446 = vmul.f32 %v2378, %v2381
        %v2447 = vld [vmem:[%s4] sm:$0x1]
        %v2449 = vperm.slane %v2447, 0
        %v2451 = vadd.f32 %v2383, %v2449
        %v2452 = vadd.f32 %v2384, %v2449
        %v2453 = vadd.f32 %v2385, %v2449
        %v2454 = vadd.f32 %v2386, %v2449
        %v2455 = vadd.f32 %v2387, %v2449
        %v2456 = vadd.f32 %v2388, %v2449
        %v2457 = vadd.f32 %v2389, %v2449
        %v2458 = vadd.f32 %v2390, %v2449
        %v2459 = vadd.f32 %v2391, %v2449
        %v2460 = vadd.f32 %v2392, %v2449
        %v2461 = vadd.f32 %v2393, %v2449
        %v2462 = vadd.f32 %v2394, %v2449
        %v2463 = vadd.f32 %v2395, %v2449
        %v2464 = vadd.f32 %v2396, %v2449
        %v2465 = vadd.f32 %v2397, %v2449
        %v2466 = vadd.f32 %v2398, %v2449
        %v2467 = vadd.f32 %v2399, %v2449
        %v2468 = vadd.f32 %v2400, %v2449
        %v2469 = vadd.f32 %v2401, %v2449
        %v2470 = vadd.f32 %v2402, %v2449
        %v2471 = vadd.f32 %v2403, %v2449
        %v2472 = vadd.f32 %v2404, %v2449
        %v2473 = vadd.f32 %v2405, %v2449
        %v2474 = vadd.f32 %v2406, %v2449
        %v2475 = vadd.f32 %v2407, %v2449
        %v2476 = vadd.f32 %v2408, %v2449
        %v2477 = vadd.f32 %v2409, %v2449
        %v2478 = vadd.f32 %v2410, %v2449
        %v2479 = vadd.f32 %v2411, %v2449
        %v2480 = vadd.f32 %v2412, %v2449
        %v2481 = vadd.f32 %v2413, %v2449
        %v2482 = vadd.f32 %v2414, %v2449
        %v2483 = vadd.f32 %v2415, %v2449
        %v2484 = vadd.f32 %v2416, %v2449
        %v2485 = vadd.f32 %v2417, %v2449
        %v2486 = vadd.f32 %v2418, %v2449
        %v2487 = vadd.f32 %v2419, %v2449
        %v2488 = vadd.f32 %v2420, %v2449
        %v2489 = vadd.f32 %v2421, %v2449
        %v2490 = vadd.f32 %v2422, %v2449
        %v2491 = vadd.f32 %v2423, %v2449
        %v2492 = vadd.f32 %v2424, %v2449
        %v2493 = vadd.f32 %v2425, %v2449
        %v2494 = vadd.f32 %v2426, %v2449
        %v2495 = vadd.f32 %v2427, %v2449
        %v2496 = vadd.f32 %v2428, %v2449
        %v2497 = vadd.f32 %v2429, %v2449
        %v2498 = vadd.f32 %v2430, %v2449
        %v2499 = vadd.f32 %v2431, %v2449
        %v2500 = vadd.f32 %v2432, %v2449
        %v2501 = vadd.f32 %v2433, %v2449
        %v2502 = vadd.f32 %v2434, %v2449
        %v2503 = vadd.f32 %v2435, %v2449
        %v2504 = vadd.f32 %v2436, %v2449
        %v2505 = vadd.f32 %v2437, %v2449
        %v2506 = vadd.f32 %v2438, %v2449
        %v2507 = vadd.f32 %v2439, %v2449
        %v2508 = vadd.f32 %v2440, %v2449
        %v2509 = vadd.f32 %v2441, %v2449
        %v2510 = vadd.f32 %v2442, %v2449
        %v2511 = vadd.f32 %v2443, %v2449
        %v2512 = vadd.f32 %v2444, %v2449
        %v2513 = vadd.f32 %v2445, %v2449
        %v2514 = vadd.f32 %v2446, %v2449
        %v2515 = vmax.f32 %v2451, 0.0
        %v2516 = vmax.f32 %v2452, 0.0
        %v2517 = vmax.f32 %v2453, 0.0
        %v2518 = vmax.f32 %v2454, 0.0
        %v2519 = vmax.f32 %v2455, 0.0
        %v2520 = vmax.f32 %v2456, 0.0
        %v2521 = vmax.f32 %v2457, 0.0
        %v2522 = vmax.f32 %v2458, 0.0
        %v2523 = vmax.f32 %v2459, 0.0
        %v2524 = vmax.f32 %v2460, 0.0
        %v2525 = vmax.f32 %v2461, 0.0
        %v2526 = vmax.f32 %v2462, 0.0
        %v2527 = vmax.f32 %v2463, 0.0
        %v2528 = vmax.f32 %v2464, 0.0
        %v2529 = vmax.f32 %v2465, 0.0
        %v2530 = vmax.f32 %v2466, 0.0
        %v2531 = vmax.f32 %v2467, 0.0
        %v2532 = vmax.f32 %v2468, 0.0
        %v2533 = vmax.f32 %v2469, 0.0
        %v2534 = vmax.f32 %v2470, 0.0
        %v2535 = vmax.f32 %v2471, 0.0
        %v2536 = vmax.f32 %v2472, 0.0
        %v2537 = vmax.f32 %v2473, 0.0
        %v2538 = vmax.f32 %v2474, 0.0
        %v2539 = vmax.f32 %v2475, 0.0
        %v2540 = vmax.f32 %v2476, 0.0
        %v2541 = vmax.f32 %v2477, 0.0
        %v2542 = vmax.f32 %v2478, 0.0
        %v2543 = vmax.f32 %v2479, 0.0
        %v2544 = vmax.f32 %v2480, 0.0
        %v2545 = vmax.f32 %v2481, 0.0
        %v2546 = vmax.f32 %v2482, 0.0
        %v2547 = vmax.f32 %v2483, 0.0
        %v2548 = vmax.f32 %v2484, 0.0
        %v2549 = vmax.f32 %v2485, 0.0
        %v2550 = vmax.f32 %v2486, 0.0
        %v2551 = vmax.f32 %v2487, 0.0
        %v2552 = vmax.f32 %v2488, 0.0
        %v2553 = vmax.f32 %v2489, 0.0
        %v2554 = vmax.f32 %v2490, 0.0
        %v2555 = vmax.f32 %v2491, 0.0
        %v2556 = vmax.f32 %v2492, 0.0
        %v2557 = vmax.f32 %v2493, 0.0
        %v2558 = vmax.f32 %v2494, 0.0
        %v2559 = vmax.f32 %v2495, 0.0
        %v2560 = vmax.f32 %v2496, 0.0
        %v2561 = vmax.f32 %v2497, 0.0
        %v2562 = vmax.f32 %v2498, 0.0
        %v2563 = vmax.f32 %v2499, 0.0
        %v2564 = vmax.f32 %v2500, 0.0
        %v2565 = vmax.f32 %v2501, 0.0
        %v2566 = vmax.f32 %v2502, 0.0
        %v2567 = vmax.f32 %v2503, 0.0
        %v2568 = vmax.f32 %v2504, 0.0
        %v2569 = vmax.f32 %v2505, 0.0
        %v2570 = vmax.f32 %v2506, 0.0
        %v2571 = vmax.f32 %v2507, 0.0
        %v2572 = vmax.f32 %v2508, 0.0
        %v2573 = vmax.f32 %v2509, 0.0
        %v2574 = vmax.f32 %v2510, 0.0
        %v2575 = vmax.f32 %v2511, 0.0
        %v2576 = vmax.f32 %v2512, 0.0
        %v2577 = vmax.f32 %v2513, 0.0
        %v2578 = vmax.f32 %v2514, 0.0
        %v2579 = vpack.c.bf16 %v2515, %v2515
        %v2580 = vpack.c.bf16 %v2516, %v2516
        %v2581 = vpack.c.bf16 %v2517, %v2517
        %v2582 = vpack.c.bf16 %v2518, %v2518
        %v2583 = vpack.c.bf16 %v2519, %v2519
        %v2584 = vpack.c.bf16 %v2520, %v2520
        %v2585 = vpack.c.bf16 %v2521, %v2521
        %v2586 = vpack.c.bf16 %v2522, %v2522
        %v2587 = vpack.c.bf16 %v2523, %v2523
        %v2588 = vpack.c.bf16 %v2524, %v2524
        %v2589 = vpack.c.bf16 %v2525, %v2525
        %v2590 = vpack.c.bf16 %v2526, %v2526
        %v2591 = vpack.c.bf16 %v2527, %v2527
        %v2592 = vpack.c.bf16 %v2528, %v2528
        %v2593 = vpack.c.bf16 %v2529, %v2529
        %v2594 = vpack.c.bf16 %v2530, %v2530
        %v2595 = vpack.c.bf16 %v2531, %v2531
        %v2596 = vpack.c.bf16 %v2532, %v2532
        %v2597 = vpack.c.bf16 %v2533, %v2533
        %v2598 = vpack.c.bf16 %v2534, %v2534
        %v2599 = vpack.c.bf16 %v2535, %v2535
        %v2600 = vpack.c.bf16 %v2536, %v2536
        %v2601 = vpack.c.bf16 %v2537, %v2537
        %v2602 = vpack.c.bf16 %v2538, %v2538
        %v2603 = vpack.c.bf16 %v2539, %v2539
        %v2604 = vpack.c.bf16 %v2540, %v2540
        %v2605 = vpack.c.bf16 %v2541, %v2541
        %v2606 = vpack.c.bf16 %v2542, %v2542
        %v2607 = vpack.c.bf16 %v2543, %v2543
        %v2608 = vpack.c.bf16 %v2544, %v2544
        %v2609 = vpack.c.bf16 %v2545, %v2545
        %v2610 = vpack.c.bf16 %v2546, %v2546
        %v2611 = vpack.c.bf16 %v2547, %v2547
        %v2612 = vpack.c.bf16 %v2548, %v2548
        %v2613 = vpack.c.bf16 %v2549, %v2549
        %v2614 = vpack.c.bf16 %v2550, %v2550
        %v2615 = vpack.c.bf16 %v2551, %v2551
        %v2616 = vpack.c.bf16 %v2552, %v2552
        %v2617 = vpack.c.bf16 %v2553, %v2553
        %v2618 = vpack.c.bf16 %v2554, %v2554
        %v2619 = vpack.c.bf16 %v2555, %v2555
        %v2620 = vpack.c.bf16 %v2556, %v2556
        %v2621 = vpack.c.bf16 %v2557, %v2557
        %v2622 = vpack.c.bf16 %v2558, %v2558
        %v2623 = vpack.c.bf16 %v2559, %v2559
        %v2624 = vpack.c.bf16 %v2560, %v2560
        %v2625 = vpack.c.bf16 %v2561, %v2561
        %v2626 = vpack.c.bf16 %v2562, %v2562
        %v2627 = vpack.c.bf16 %v2563, %v2563
        %v2628 = vpack.c.bf16 %v2564, %v2564
        %v2629 = vpack.c.bf16 %v2565, %v2565
        %v2630 = vpack.c.bf16 %v2566, %v2566
        %v2631 = vpack.c.bf16 %v2567, %v2567
        %v2632 = vpack.c.bf16 %v2568, %v2568
        %v2633 = vpack.c.bf16 %v2569, %v2569
        %v2634 = vpack.c.bf16 %v2570, %v2570
        %v2635 = vpack.c.bf16 %v2571, %v2571
        %v2636 = vpack.c.bf16 %v2572, %v2572
        %v2637 = vpack.c.bf16 %v2573, %v2573
        %v2638 = vpack.c.bf16 %v2574, %v2574
        %v2639 = vpack.c.bf16 %v2575, %v2575
        %v2640 = vpack.c.bf16 %v2576, %v2576
        %v2641 = vpack.c.bf16 %v2577, %v2577
        %v2642 = vpack.c.bf16 %v2578, %v2578
        %2643 = vst [vmem:[%s233] sm:$0xf] %v2579
        %2644 = vst [vmem:[%s233 + $0x4] sm:$0xf] %v2580
        %2645 = vst [vmem:[%s233 + $0x8] sm:$0xf] %v2581
        %2646 = vst [vmem:[%s233 + $0xc] sm:$0xf] %v2582
        %2647 = vst [vmem:[%s233 + $0x10] sm:$0xf] %v2583
        %2648 = vst [vmem:[%s233 + $0x14] sm:$0xf] %v2584
        %2649 = vst [vmem:[%s233 + $0x18] sm:$0xf] %v2585
        %2650 = vst [vmem:[%s233 + $0x1c] sm:$0xf] %v2586
        %2651 = vst [vmem:[%s233 + $0x20] sm:$0xf] %v2587
        %2652 = vst [vmem:[%s233 + $0x24] sm:$0xf] %v2588
        %2653 = vst [vmem:[%s233 + $0x28] sm:$0xf] %v2589
        %2654 = vst [vmem:[%s233 + $0x2c] sm:$0xf] %v2590
        %2655 = vst [vmem:[%s233 + $0x30] sm:$0xf] %v2591
        %2656 = vst [vmem:[%s233 + $0x34] sm:$0xf] %v2592
        %2657 = vst [vmem:[%s233 + $0x38] sm:$0xf] %v2593
        %2658 = vst [vmem:[%s233 + $0x3c] sm:$0xf] %v2594
        %2659 = vst [vmem:[%s233 + $0x40] sm:$0xf] %v2595
        %2660 = vst [vmem:[%s233 + $0x44] sm:$0xf] %v2596
        %2661 = vst [vmem:[%s233 + $0x48] sm:$0xf] %v2597
        %2662 = vst [vmem:[%s233 + $0x4c] sm:$0xf] %v2598
        %2663 = vst [vmem:[%s233 + $0x50] sm:$0xf] %v2599
        %2664 = vst [vmem:[%s233 + $0x54] sm:$0xf] %v2600
        %2665 = vst [vmem:[%s233 + $0x58] sm:$0xf] %v2601
        %2666 = vst [vmem:[%s233 + $0x5c] sm:$0xf] %v2602
        %2667 = vst [vmem:[%s233 + $0x60] sm:$0xf] %v2603
        %2668 = vst [vmem:[%s233 + $0x64] sm:$0xf] %v2604
        %2669 = vst [vmem:[%s233 + $0x68] sm:$0xf] %v2605
        %2670 = vst [vmem:[%s233 + $0x6c] sm:$0xf] %v2606
        %2671 = vst [vmem:[%s233 + $0x70] sm:$0xf] %v2607
        %2672 = vst [vmem:[%s233 + $0x74] sm:$0xf] %v2608
        %2673 = vst [vmem:[%s233 + $0x78] sm:$0xf] %v2609
        %2674 = vst [vmem:[%s233 + $0x7c] sm:$0xf] %v2610
        %2675 = vst [vmem:[%s233 + $0x80] sm:$0xf] %v2611
        %2676 = vst [vmem:[%s233 + $0x84] sm:$0xf] %v2612
        %2677 = vst [vmem:[%s233 + $0x88] sm:$0xf] %v2613
        %2678 = vst [vmem:[%s233 + $0x8c] sm:$0xf] %v2614
        %2679 = vst [vmem:[%s233 + $0x90] sm:$0xf] %v2615
        %2680 = vst [vmem:[%s233 + $0x94] sm:$0xf] %v2616
        %2681 = vst [vmem:[%s233 + $0x98] sm:$0xf] %v2617
        %2682 = vst [vmem:[%s233 + $0x9c] sm:$0xf] %v2618
        %2683 = vst [vmem:[%s233 + $0xa0] sm:$0xf] %v2619
        %2684 = vst [vmem:[%s233 + $0xa4] sm:$0xf] %v2620
        %2685 = vst [vmem:[%s233 + $0xa8] sm:$0xf] %v2621
        %2686 = vst [vmem:[%s233 + $0xac] sm:$0xf] %v2622
        %2687 = vst [vmem:[%s233 + $0xb0] sm:$0xf] %v2623
        %2688 = vst [vmem:[%s233 + $0xb4] sm:$0xf] %v2624
        %2689 = vst [vmem:[%s233 + $0xb8] sm:$0xf] %v2625
        %2690 = vst [vmem:[%s233 + $0xbc] sm:$0xf] %v2626
        %2691 = vst [vmem:[%s233 + $0xc0] sm:$0xf] %v2627
        %2692 = vst [vmem:[%s233 + $0xc4] sm:$0xf] %v2628
        %2693 = vst [vmem:[%s233 + $0xc8] sm:$0xf] %v2629
        %2694 = vst [vmem:[%s233 + $0xcc] sm:$0xf] %v2630
        %2695 = vst [vmem:[%s233 + $0xd0] sm:$0xf] %v2631
        %2696 = vst [vmem:[%s233 + $0xd4] sm:$0xf] %v2632
        %2697 = vst [vmem:[%s233 + $0xd8] sm:$0xf] %v2633
        %2698 = vst [vmem:[%s233 + $0xdc] sm:$0xf] %v2634
        %2699 = vst [vmem:[%s233 + $0xe0] sm:$0xf] %v2635
        %2700 = vst [vmem:[%s233 + $0xe4] sm:$0xf] %v2636
        %2701 = vst [vmem:[%s233 + $0xe8] sm:$0xf] %v2637
        %2702 = vst [vmem:[%s233 + $0xec] sm:$0xf] %v2638
        %2703 = vst [vmem:[%s233 + $0xf0] sm:$0xf] %v2639
        %2704 = vst [vmem:[%s233 + $0xf4] sm:$0xf] %v2640
        %2705 = vst [vmem:[%s233 + $0xf8] sm:$0xf] %v2641
        %2706 = vst [vmem:[%s233 + $0xfc] sm:$0xf] %v2642
        %s2707 = sand.u32 %s142, 1
        %s2708 = scalar_lea.sflag [#allocation3], %s2707
        %s2709 = sand.u32 %s142, 1
        %s2710 = smul.addr %s2709, 256
        %s2711 = scalar_lea.vmem [#allocation2], %s2710
        // Predicated region
        $region41: #{tpu_custom_call.1} parent=39 // pred_check
          %p2712 = pneg %p152
        $region42: #{tpu_custom_call.1} parent=39 // pred_check_branch
          %2714 = sbr.rel (%p2712) target = $region44
        $region43: #{tpu_custom_call.1} parent=39 // pred_region
          %s2715 = smul.u32 64, %s19
          %2717 = vsyncadd %s2708, 0
          %s2718 = smul.addr %s2715, 4
          %s2719 = scalar_lea.hbm %s5, %s2718
          %s2720 = sshll.u32 %s2711, 4
          %s2721 = int_to_ptr.vmem [resolvable:$true] %s2720
          %s2722 = sshll.u32 %s2719, 4
          %s2723 = int_to_ptr.hbm [resolvable:$true] %s2722
          %2728 = dma.vmem_to_hbm [thread:$0]  %s2721, 4096, %s2723, %s2708, 64, 64, 4
        $region44: #{tpu_custom_call.1} parent=39 // pred_fallthru
          _
      $region40: #{tpu_custom_call.1} parent=5 // pred_fallthru
        _
      %p2729 = scmp.le.s32.totalorder 2, %s14
      // Predicated region
      $region45: #{tpu_custom_call.1} parent=5 // pred_check
        %p2730 = pneg %p2729
      $region46: #{tpu_custom_call.1} parent=5 // pred_check_branch
        %2732 = sbr.rel (%p2730) target = $region48
      $region47: #{tpu_custom_call.1} parent=5 // pred_region
        %s2733 = ssub.s32 %s14, 2
        // Predicated region
        $region49: #{tpu_custom_call.1} parent=47 // pred_check
          %p2734 = pneg %p158
        $region50: #{tpu_custom_call.1} parent=47 // pred_check_branch
          %2736 = sbr.rel (%p2734) target = $region52
        $region51: #{tpu_custom_call.1} parent=47 // pred_region
          %s2737 = sand.u32 %s143, 1
          %s2738 = scalar_lea.sflag [#allocation3], %s2737
          %s2739 = sand.u32 %s143, 1
          %s2740 = smul.addr %s2739, 256
          %s2741 = scalar_lea.vmem [#allocation2], %s2740
          %2743 = dma.done %s2738, 4096
        $region52: #{tpu_custom_call.1} parent=47 // pred_fallthru
          _
      $region48: #{tpu_custom_call.1} parent=5 // pred_fallthru
        _
    $region6: #{tpu_custom_call.1} parent=1 // loop_footer
      %s18 = sadd.s32 1, %s14
    $region7: #{tpu_custom_call.1} parent=1 // loop_footer_branch
      %13 = sbr.rel target = $region3
    $region8: #{tpu_custom_call.1} parent=1 // loop_exit
      _
    %2744 = vsyncpa [#allocation3], 1
    %s2745 = scalar_lea.sflag [#allocation3], 1
    %2746 = vsyncpa %s2745, 1

</llo_original>
